<compile_context>
chip_gen: v7x
topology: tpu7x:2x2x1
jax: 0.10.0
libtpu: 0.0.40
codegen_flags: <defaults>
</compile_context>

<pallas_src>
import jax
import jax.numpy as jnp
from jax.experimental import pallas as pl
from jax.experimental.pallas import tpu as pltpu


def lstm_fc_kernel(x_ref, wih_ref, whh_ref, b_ref, wfc_ref, bfc_ref, out_ref):
    # x_ref:   (B, T, I)  f32   batch-first input (PyTorch layout), cast in-kernel
    # wih_ref: (I, 4H)    bf16  input->gates weight, i/f/o columns pre-scaled by 0.5
    # whh_ref: (H, 4H)    bf16  hidden->gates weight, i/f/o columns pre-scaled by 0.5
    # b_ref:   (1, 4H)    f32   combined bias (b_ih + b_hh), i/f/o entries pre-scaled by 0.5
    # wfc_ref: (1, H)     f32   final linear weight (NOT pre-scaled)
    # bfc_ref: (1, 1)     f32   final linear bias
    # out_ref: (B, 1)     f32
    B, T, I = x_ref.shape
    H = whh_ref.shape[0]

    whh = whh_ref[...]                      # (H, 4H) bf16, resident across steps
    b = b_ref[...]                          # (1, 4H) f32

    # Hoisted input projection: one big matmul off the recurrent critical path.
    # (B, T, I) -> (B*T, I) keeps the minor dim, so the reshape is layout-free; the bf16
    # cast rides idle VPU slots in-kernel instead of being a wrapper-side XLA launch.
    x2d = x_ref[...].reshape(B * T, I).astype(jnp.bfloat16)
    xg = (
        jnp.dot(x2d, wih_ref[...], preferred_element_type=jnp.float32) + b
    ).reshape(B, T, 4 * H)                  # (B, T, 4H) f32, batch-major

    h = jnp.zeros((B, H), jnp.float32)
    c = jnp.zeros((B, H), jnp.float32)

    # Fully unrolled recurrence: T is small and static; static per-step slices of xg are
    # independent of h, so they can be scheduled off the serial recurrence chain.
    for t in range(T):
        # Single per-step MXU push: (B, H) x (H, 4H), f32 accumulate.
        gates = xg[:, t, :] + jnp.dot(
            h.astype(whh.dtype), whh, preferred_element_type=jnp.float32
        )                                   # (B, 4H) = (8, 128): one f32 vreg
        # Single EUP pass: i/f/o pre-activations were pre-scaled by 0.5 via the weights,
        # so sigmoid(raw) == 0.5 * tanh(gates) + 0.5 (one VPU FMA); g gate is tanh(raw).
        th = jnp.tanh(gates)
        sg = th * 0.5 + 0.5
        # 32-lane slices of the activation vregs (offsets 0/32/64/96) — kept as plain
        # slices so they lower to XLU rotates/selects that co-issue with VPU work.
        i_g = sg[:, 0 * H:1 * H]
        f_g = sg[:, 1 * H:2 * H]
        g_g = th[:, 2 * H:3 * H]            # g columns are unscaled -> tanh(raw)
        o_g = sg[:, 3 * H:4 * H]
        c = f_g * c + i_g * g_g
        h = o_g * jnp.tanh(c)

    # Final FC as broadcast-multiply + lane reduction (VPU/XLU), no 1-column MXU matmul.
    # TODO(synk): make the output lane-dense ((1, B) row) once B >= 128.
    out_ref[...] = jnp.sum(h * wfc_ref[...], axis=-1, keepdims=True) + bfc_ref[...]


def rnn_model_forward(x, params):
    """x: (B, T, I) float32. Returns (B,) float32 — matches RNNModel.forward."""
    B = x.shape[0]
    # Grid-less single call: everything fits VMEM at these sizes.
    # TODO(synk): for large B, add a batch-parallel grid axis (2 TCs on v7x).
    out = pl.pallas_call(
        lstm_fc_kernel,
        out_shape=jax.ShapeDtypeStruct((B, 1), jnp.float32),
        in_specs=[pl.BlockSpec(memory_space=pltpu.MemorySpace.VMEM)] * 6,
        out_specs=pl.BlockSpec(memory_space=pltpu.MemorySpace.VMEM),
    )(
        x,                     # (B, T, I) f32
        params["w_ih"],        # (I, 4H)   bf16, i/f/o columns * 0.5
        params["w_hh"],        # (H, 4H)   bf16, i/f/o columns * 0.5
        params["b"],           # (1, 4H)   f32,  i/f/o entries * 0.5
        params["w_fc_t"],      # (1, H)    f32
        params["b_fc"],        # (1, 1)    f32
    )
    return out[:, 0]  # .squeeze() -> (B,)


def init_raw_params(key, input_size, hidden_size):
    """Raw f32 params mimicking PyTorch LSTM/Linear uniform(-1/sqrt(H), 1/sqrt(H)).

    PyTorch stores weight_ih_l0 as (4H, I); here kept pre-transposed as (I, 4H).
    Gate order i, f, g, o.
    """
    k = 1.0 / jnp.sqrt(jnp.float32(hidden_size))
    keys = jax.random.split(key, 6)
    return {
        "w_ih": jax.random.uniform(keys[0], (input_size, 4 * hidden_size), jnp.float32, -k, k),
        "w_hh": jax.random.uniform(keys[1], (hidden_size, 4 * hidden_size), jnp.float32, -k, k),
        "b_ih": jax.random.uniform(keys[2], (4 * hidden_size,), jnp.float32, -k, k),
        "b_hh": jax.random.uniform(keys[3], (4 * hidden_size,), jnp.float32, -k, k),
        "w_fc": jax.random.uniform(keys[4], (1, hidden_size), jnp.float32, -k, k),
        "b_fc": jax.random.uniform(keys[5], (1,), jnp.float32, -k, k),
    }


def pack_kernel_params(raw):
    """One-time prep: fold the 0.5 sigmoid pre-scale into the i/f/o gate columns and
    pre-cast the MXU operands to bf16 (no per-call converts in the wrapper)."""
    H = raw["w_hh"].shape[0]
    scale = jnp.concatenate([
        jnp.full((H,), 0.5, jnp.float32),   # i
        jnp.full((H,), 0.5, jnp.float32),   # f
        jnp.ones((H,), jnp.float32),        # g (tanh gate, unscaled)
        jnp.full((H,), 0.5, jnp.float32),   # o
    ])
    b = (raw["b_ih"] + raw["b_hh"]) * scale
    return {
        "w_ih": (raw["w_ih"] * scale).astype(jnp.bfloat16),
        "w_hh": (raw["w_hh"] * scale).astype(jnp.bfloat16),
        "b": b.reshape(1, 4 * H),
        "w_fc_t": raw["w_fc"],              # (1, H), not pre-scaled
        "b_fc": raw["b_fc"].reshape(1, 1),
    }


def lstm_fc_reference(x, raw):
    """Pure-JAX f32 reference matching nn.LSTM(batch_first=True) + nn.Linear(H, 1)."""
    B, T, _ = x.shape
    H = raw["w_hh"].shape[0]
    b = raw["b_ih"] + raw["b_hh"]
    h = jnp.zeros((B, H), jnp.float32)
    c = jnp.zeros((B, H), jnp.float32)
    for t in range(T):
        g = x[:, t, :] @ raw["w_ih"] + h @ raw["w_hh"] + b
        i_g = jax.nn.sigmoid(g[:, 0 * H:1 * H])
        f_g = jax.nn.sigmoid(g[:, 1 * H:2 * H])
        g_g = jnp.tanh(g[:, 2 * H:3 * H])
        o_g = jax.nn.sigmoid(g[:, 3 * H:4 * H])
        c = f_g * c + i_g * g_g
        h = o_g * jnp.tanh(c)
    return (h @ raw["w_fc"].T + raw["b_fc"]).reshape(B)


if __name__ == "__main__":
    B, T, I, H = 8, 8, 16, 32  # small shapes; 4H = 128 => lane-aligned gate tile

    key = jax.random.PRNGKey(0)
    kx, kp = jax.random.split(key)
    x = jax.random.normal(kx, (B, T, I), dtype=jnp.float32)
    raw = init_raw_params(kp, I, H)
    params = pack_kernel_params(raw)

    y = rnn_model_forward(x, params)
    jax.block_until_ready(y)
    assert y.shape == (B,), y.shape

    # bf16 MXU operands => loose tolerance vs the f32 reference.
    y_ref = lstm_fc_reference(x, raw)
    assert jnp.allclose(y, y_ref, atol=3e-2, rtol=3e-2), (y, y_ref)

    print("KERNEL_OK")
</pallas_src>

<mosaic_0001>
module attributes {stable_mosaic.version = 11 : i64} {
  func.func @lstm_fc_kernel(%arg0: memref<8x8x16xf32, #tpu.memory_space<vmem>>, %arg1: memref<16x128xbf16, #tpu.memory_space<vmem>>, %arg2: memref<32x128xbf16, #tpu.memory_space<vmem>>, %arg3: memref<1x128xf32, #tpu.memory_space<vmem>>, %arg4: memref<1x32xf32, #tpu.memory_space<vmem>>, %arg5: memref<1x1xf32, #tpu.memory_space<vmem>>, %arg6: memref<8x1xf32, #tpu.memory_space<vmem>>) attributes {dimension_semantics = [], scalar_prefetch = 0 : i64, scratch_operands = 0 : i64, tpu.core_type = #tpu.core_type<tc>} {
    %c0 = arith.constant 0 : index
    %c0_0 = arith.constant 0 : index
    %0 = vector.load %arg2[%c0, %c0_0] : memref<32x128xbf16, #tpu.memory_space<vmem>>, vector<32x128xbf16>
    %c0_1 = arith.constant 0 : index
    %c0_2 = arith.constant 0 : index
    %1 = vector.load %arg3[%c0_1, %c0_2] : memref<1x128xf32, #tpu.memory_space<vmem>>, vector<1x128xf32>
    %c0_3 = arith.constant 0 : index
    %c0_4 = arith.constant 0 : index
    %c0_5 = arith.constant 0 : index
    %2 = vector.load %arg0[%c0_3, %c0_4, %c0_5] : memref<8x8x16xf32, #tpu.memory_space<vmem>>, vector<8x8x16xf32>
    %3 = vector.shape_cast %2 : vector<8x8x16xf32> to vector<64x16xf32>
    %4 = arith.truncf %3 : vector<64x16xf32> to vector<64x16xbf16>
    %c0_6 = arith.constant 0 : index
    %c0_7 = arith.constant 0 : index
    %5 = vector.load %arg1[%c0_6, %c0_7] : memref<16x128xbf16, #tpu.memory_space<vmem>>, vector<16x128xbf16>
    %cst = arith.constant dense<0.000000e+00> : vector<64x128xf32>
    %6 = tpu.matmul %4, %5, %cst {dimension_numbers = #tpu.dot_dimension_numbers<[1], [0], [0], [1], [0, 0, 1, 1], [], []>} : vector<64x16xbf16>, vector<16x128xbf16>, vector<64x128xf32> -> vector<64x128xf32>
    %7 = vector.broadcast %1 : vector<1x128xf32> to vector<64x128xf32>
    %8 = arith.addf %6, %7 : vector<64x128xf32>
    %9 = vector.shape_cast %8 : vector<64x128xf32> to vector<8x8x128xf32>
    %cst_8 = arith.constant 0.000000e+00 : f32
    %10 = vector.broadcast %cst_8 : f32 to vector<8x32xf32>
    %cst_9 = arith.constant 0.000000e+00 : f32
    %11 = vector.broadcast %cst_9 : f32 to vector<8x32xf32>
    %12 = vector.extract_strided_slice %9 {offsets = [0, 0, 0], sizes = [8, 1, 128], strides = [1, 1, 1]} : vector<8x8x128xf32> to vector<8x1x128xf32>
    %13 = vector.shape_cast %12 : vector<8x1x128xf32> to vector<8x128xf32>
    %14 = arith.truncf %10 : vector<8x32xf32> to vector<8x32xbf16>
    %cst_10 = arith.constant dense<0.000000e+00> : vector<8x128xf32>
    %15 = tpu.matmul %14, %0, %cst_10 {dimension_numbers = #tpu.dot_dimension_numbers<[1], [0], [0], [1], [0, 0, 1, 1], [], []>} : vector<8x32xbf16>, vector<32x128xbf16>, vector<8x128xf32> -> vector<8x128xf32>
    %16 = arith.addf %13, %15 : vector<8x128xf32>
    %17 = math.tanh %16 : vector<8x128xf32>
    %cst_11 = arith.constant 5.000000e-01 : f32
    %18 = vector.broadcast %cst_11 : f32 to vector<8x128xf32>
    %19 = arith.mulf %17, %18 : vector<8x128xf32>
    %cst_12 = arith.constant 5.000000e-01 : f32
    %20 = vector.broadcast %cst_12 : f32 to vector<8x128xf32>
    %21 = arith.addf %19, %20 : vector<8x128xf32>
    %22 = vector.extract_strided_slice %21 {offsets = [0, 0], sizes = [8, 32], strides = [1, 1]} : vector<8x128xf32> to vector<8x32xf32>
    %23 = vector.extract_strided_slice %21 {offsets = [0, 32], sizes = [8, 32], strides = [1, 1]} : vector<8x128xf32> to vector<8x32xf32>
    %24 = vector.extract_strided_slice %17 {offsets = [0, 64], sizes = [8, 32], strides = [1, 1]} : vector<8x128xf32> to vector<8x32xf32>
    %25 = vector.extract_strided_slice %21 {offsets = [0, 96], sizes = [8, 32], strides = [1, 1]} : vector<8x128xf32> to vector<8x32xf32>
    %26 = arith.mulf %23, %11 : vector<8x32xf32>
    %27 = arith.mulf %22, %24 : vector<8x32xf32>
    %28 = arith.addf %26, %27 : vector<8x32xf32>
    %29 = math.tanh %28 : vector<8x32xf32>
    %30 = arith.mulf %25, %29 : vector<8x32xf32>
    %31 = vector.extract_strided_slice %9 {offsets = [0, 1, 0], sizes = [8, 1, 128], strides = [1, 1, 1]} : vector<8x8x128xf32> to vector<8x1x128xf32>
    %32 = vector.shape_cast %31 : vector<8x1x128xf32> to vector<8x128xf32>
    %33 = arith.truncf %30 : vector<8x32xf32> to vector<8x32xbf16>
    %cst_13 = arith.constant dense<0.000000e+00> : vector<8x128xf32>
    %34 = tpu.matmul %33, %0, %cst_13 {dimension_numbers = #tpu.dot_dimension_numbers<[1], [0], [0], [1], [0, 0, 1, 1], [], []>} : vector<8x32xbf16>, vector<32x128xbf16>, vector<8x128xf32> -> vector<8x128xf32>
    %35 = arith.addf %32, %34 : vector<8x128xf32>
    %36 = math.tanh %35 : vector<8x128xf32>
    %cst_14 = arith.constant 5.000000e-01 : f32
    %37 = vector.broadcast %cst_14 : f32 to vector<8x128xf32>
    %38 = arith.mulf %36, %37 : vector<8x128xf32>
    %cst_15 = arith.constant 5.000000e-01 : f32
    %39 = vector.broadcast %cst_15 : f32 to vector<8x128xf32>
    %40 = arith.addf %38, %39 : vector<8x128xf32>
    %41 = vector.extract_strided_slice %40 {offsets = [0, 0], sizes = [8, 32], strides = [1, 1]} : vector<8x128xf32> to vector<8x32xf32>
    %42 = vector.extract_strided_slice %40 {offsets = [0, 32], sizes = [8, 32], strides = [1, 1]} : vector<8x128xf32> to vector<8x32xf32>
    %43 = vector.extract_strided_slice %36 {offsets = [0, 64], sizes = [8, 32], strides = [1, 1]} : vector<8x128xf32> to vector<8x32xf32>
    %44 = vector.extract_strided_slice %40 {offsets = [0, 96], sizes = [8, 32], strides = [1, 1]} : vector<8x128xf32> to vector<8x32xf32>
    %45 = arith.mulf %42, %28 : vector<8x32xf32>
    %46 = arith.mulf %41, %43 : vector<8x32xf32>
    %47 = arith.addf %45, %46 : vector<8x32xf32>
    %48 = math.tanh %47 : vector<8x32xf32>
    %49 = arith.mulf %44, %48 : vector<8x32xf32>
    %50 = vector.extract_strided_slice %9 {offsets = [0, 2, 0], sizes = [8, 1, 128], strides = [1, 1, 1]} : vector<8x8x128xf32> to vector<8x1x128xf32>
    %51 = vector.shape_cast %50 : vector<8x1x128xf32> to vector<8x128xf32>
    %52 = arith.truncf %49 : vector<8x32xf32> to vector<8x32xbf16>
    %cst_16 = arith.constant dense<0.000000e+00> : vector<8x128xf32>
    %53 = tpu.matmul %52, %0, %cst_16 {dimension_numbers = #tpu.dot_dimension_numbers<[1], [0], [0], [1], [0, 0, 1, 1], [], []>} : vector<8x32xbf16>, vector<32x128xbf16>, vector<8x128xf32> -> vector<8x128xf32>
    %54 = arith.addf %51, %53 : vector<8x128xf32>
    %55 = math.tanh %54 : vector<8x128xf32>
    %cst_17 = arith.constant 5.000000e-01 : f32
    %56 = vector.broadcast %cst_17 : f32 to vector<8x128xf32>
    %57 = arith.mulf %55, %56 : vector<8x128xf32>
    %cst_18 = arith.constant 5.000000e-01 : f32
    %58 = vector.broadcast %cst_18 : f32 to vector<8x128xf32>
    %59 = arith.addf %57, %58 : vector<8x128xf32>
    %60 = vector.extract_strided_slice %59 {offsets = [0, 0], sizes = [8, 32], strides = [1, 1]} : vector<8x128xf32> to vector<8x32xf32>
    %61 = vector.extract_strided_slice %59 {offsets = [0, 32], sizes = [8, 32], strides = [1, 1]} : vector<8x128xf32> to vector<8x32xf32>
    %62 = vector.extract_strided_slice %55 {offsets = [0, 64], sizes = [8, 32], strides = [1, 1]} : vector<8x128xf32> to vector<8x32xf32>
    %63 = vector.extract_strided_slice %59 {offsets = [0, 96], sizes = [8, 32], strides = [1, 1]} : vector<8x128xf32> to vector<8x32xf32>
    %64 = arith.mulf %61, %47 : vector<8x32xf32>
    %65 = arith.mulf %60, %62 : vector<8x32xf32>
    %66 = arith.addf %64, %65 : vector<8x32xf32>
    %67 = math.tanh %66 : vector<8x32xf32>
    %68 = arith.mulf %63, %67 : vector<8x32xf32>
    %69 = vector.extract_strided_slice %9 {offsets = [0, 3, 0], sizes = [8, 1, 128], strides = [1, 1, 1]} : vector<8x8x128xf32> to vector<8x1x128xf32>
    %70 = vector.shape_cast %69 : vector<8x1x128xf32> to vector<8x128xf32>
    %71 = arith.truncf %68 : vector<8x32xf32> to vector<8x32xbf16>
    %cst_19 = arith.constant dense<0.000000e+00> : vector<8x128xf32>
    %72 = tpu.matmul %71, %0, %cst_19 {dimension_numbers = #tpu.dot_dimension_numbers<[1], [0], [0], [1], [0, 0, 1, 1], [], []>} : vector<8x32xbf16>, vector<32x128xbf16>, vector<8x128xf32> -> vector<8x128xf32>
    %73 = arith.addf %70, %72 : vector<8x128xf32>
    %74 = math.tanh %73 : vector<8x128xf32>
    %cst_20 = arith.constant 5.000000e-01 : f32
    %75 = vector.broadcast %cst_20 : f32 to vector<8x128xf32>
    %76 = arith.mulf %74, %75 : vector<8x128xf32>
    %cst_21 = arith.constant 5.000000e-01 : f32
    %77 = vector.broadcast %cst_21 : f32 to vector<8x128xf32>
    %78 = arith.addf %76, %77 : vector<8x128xf32>
    %79 = vector.extract_strided_slice %78 {offsets = [0, 0], sizes = [8, 32], strides = [1, 1]} : vector<8x128xf32> to vector<8x32xf32>
    %80 = vector.extract_strided_slice %78 {offsets = [0, 32], sizes = [8, 32], strides = [1, 1]} : vector<8x128xf32> to vector<8x32xf32>
    %81 = vector.extract_strided_slice %74 {offsets = [0, 64], sizes = [8, 32], strides = [1, 1]} : vector<8x128xf32> to vector<8x32xf32>
    %82 = vector.extract_strided_slice %78 {offsets = [0, 96], sizes = [8, 32], strides = [1, 1]} : vector<8x128xf32> to vector<8x32xf32>
    %83 = arith.mulf %80, %66 : vector<8x32xf32>
    %84 = arith.mulf %79, %81 : vector<8x32xf32>
    %85 = arith.addf %83, %84 : vector<8x32xf32>
    %86 = math.tanh %85 : vector<8x32xf32>
    %87 = arith.mulf %82, %86 : vector<8x32xf32>
    %88 = vector.extract_strided_slice %9 {offsets = [0, 4, 0], sizes = [8, 1, 128], strides = [1, 1, 1]} : vector<8x8x128xf32> to vector<8x1x128xf32>
    %89 = vector.shape_cast %88 : vector<8x1x128xf32> to vector<8x128xf32>
    %90 = arith.truncf %87 : vector<8x32xf32> to vector<8x32xbf16>
    %cst_22 = arith.constant dense<0.000000e+00> : vector<8x128xf32>
    %91 = tpu.matmul %90, %0, %cst_22 {dimension_numbers = #tpu.dot_dimension_numbers<[1], [0], [0], [1], [0, 0, 1, 1], [], []>} : vector<8x32xbf16>, vector<32x128xbf16>, vector<8x128xf32> -> vector<8x128xf32>
    %92 = arith.addf %89, %91 : vector<8x128xf32>
    %93 = math.tanh %92 : vector<8x128xf32>
    %cst_23 = arith.constant 5.000000e-01 : f32
    %94 = vector.broadcast %cst_23 : f32 to vector<8x128xf32>
    %95 = arith.mulf %93, %94 : vector<8x128xf32>
    %cst_24 = arith.constant 5.000000e-01 : f32
    %96 = vector.broadcast %cst_24 : f32 to vector<8x128xf32>
    %97 = arith.addf %95, %96 : vector<8x128xf32>
    %98 = vector.extract_strided_slice %97 {offsets = [0, 0], sizes = [8, 32], strides = [1, 1]} : vector<8x128xf32> to vector<8x32xf32>
    %99 = vector.extract_strided_slice %97 {offsets = [0, 32], sizes = [8, 32], strides = [1, 1]} : vector<8x128xf32> to vector<8x32xf32>
    %100 = vector.extract_strided_slice %93 {offsets = [0, 64], sizes = [8, 32], strides = [1, 1]} : vector<8x128xf32> to vector<8x32xf32>
    %101 = vector.extract_strided_slice %97 {offsets = [0, 96], sizes = [8, 32], strides = [1, 1]} : vector<8x128xf32> to vector<8x32xf32>
    %102 = arith.mulf %99, %85 : vector<8x32xf32>
    %103 = arith.mulf %98, %100 : vector<8x32xf32>
    %104 = arith.addf %102, %103 : vector<8x32xf32>
    %105 = math.tanh %104 : vector<8x32xf32>
    %106 = arith.mulf %101, %105 : vector<8x32xf32>
    %107 = vector.extract_strided_slice %9 {offsets = [0, 5, 0], sizes = [8, 1, 128], strides = [1, 1, 1]} : vector<8x8x128xf32> to vector<8x1x128xf32>
    %108 = vector.shape_cast %107 : vector<8x1x128xf32> to vector<8x128xf32>
    %109 = arith.truncf %106 : vector<8x32xf32> to vector<8x32xbf16>
    %cst_25 = arith.constant dense<0.000000e+00> : vector<8x128xf32>
    %110 = tpu.matmul %109, %0, %cst_25 {dimension_numbers = #tpu.dot_dimension_numbers<[1], [0], [0], [1], [0, 0, 1, 1], [], []>} : vector<8x32xbf16>, vector<32x128xbf16>, vector<8x128xf32> -> vector<8x128xf32>
    %111 = arith.addf %108, %110 : vector<8x128xf32>
    %112 = math.tanh %111 : vector<8x128xf32>
    %cst_26 = arith.constant 5.000000e-01 : f32
    %113 = vector.broadcast %cst_26 : f32 to vector<8x128xf32>
    %114 = arith.mulf %112, %113 : vector<8x128xf32>
    %cst_27 = arith.constant 5.000000e-01 : f32
    %115 = vector.broadcast %cst_27 : f32 to vector<8x128xf32>
    %116 = arith.addf %114, %115 : vector<8x128xf32>
    %117 = vector.extract_strided_slice %116 {offsets = [0, 0], sizes = [8, 32], strides = [1, 1]} : vector<8x128xf32> to vector<8x32xf32>
    %118 = vector.extract_strided_slice %116 {offsets = [0, 32], sizes = [8, 32], strides = [1, 1]} : vector<8x128xf32> to vector<8x32xf32>
    %119 = vector.extract_strided_slice %112 {offsets = [0, 64], sizes = [8, 32], strides = [1, 1]} : vector<8x128xf32> to vector<8x32xf32>
    %120 = vector.extract_strided_slice %116 {offsets = [0, 96], sizes = [8, 32], strides = [1, 1]} : vector<8x128xf32> to vector<8x32xf32>
    %121 = arith.mulf %118, %104 : vector<8x32xf32>
    %122 = arith.mulf %117, %119 : vector<8x32xf32>
    %123 = arith.addf %121, %122 : vector<8x32xf32>
    %124 = math.tanh %123 : vector<8x32xf32>
    %125 = arith.mulf %120, %124 : vector<8x32xf32>
    %126 = vector.extract_strided_slice %9 {offsets = [0, 6, 0], sizes = [8, 1, 128], strides = [1, 1, 1]} : vector<8x8x128xf32> to vector<8x1x128xf32>
    %127 = vector.shape_cast %126 : vector<8x1x128xf32> to vector<8x128xf32>
    %128 = arith.truncf %125 : vector<8x32xf32> to vector<8x32xbf16>
    %cst_28 = arith.constant dense<0.000000e+00> : vector<8x128xf32>
    %129 = tpu.matmul %128, %0, %cst_28 {dimension_numbers = #tpu.dot_dimension_numbers<[1], [0], [0], [1], [0, 0, 1, 1], [], []>} : vector<8x32xbf16>, vector<32x128xbf16>, vector<8x128xf32> -> vector<8x128xf32>
    %130 = arith.addf %127, %129 : vector<8x128xf32>
    %131 = math.tanh %130 : vector<8x128xf32>
    %cst_29 = arith.constant 5.000000e-01 : f32
    %132 = vector.broadcast %cst_29 : f32 to vector<8x128xf32>
    %133 = arith.mulf %131, %132 : vector<8x128xf32>
    %cst_30 = arith.constant 5.000000e-01 : f32
    %134 = vector.broadcast %cst_30 : f32 to vector<8x128xf32>
    %135 = arith.addf %133, %134 : vector<8x128xf32>
    %136 = vector.extract_strided_slice %135 {offsets = [0, 0], sizes = [8, 32], strides = [1, 1]} : vector<8x128xf32> to vector<8x32xf32>
    %137 = vector.extract_strided_slice %135 {offsets = [0, 32], sizes = [8, 32], strides = [1, 1]} : vector<8x128xf32> to vector<8x32xf32>
    %138 = vector.extract_strided_slice %131 {offsets = [0, 64], sizes = [8, 32], strides = [1, 1]} : vector<8x128xf32> to vector<8x32xf32>
    %139 = vector.extract_strided_slice %135 {offsets = [0, 96], sizes = [8, 32], strides = [1, 1]} : vector<8x128xf32> to vector<8x32xf32>
    %140 = arith.mulf %137, %123 : vector<8x32xf32>
    %141 = arith.mulf %136, %138 : vector<8x32xf32>
    %142 = arith.addf %140, %141 : vector<8x32xf32>
    %143 = math.tanh %142 : vector<8x32xf32>
    %144 = arith.mulf %139, %143 : vector<8x32xf32>
    %145 = vector.extract_strided_slice %9 {offsets = [0, 7, 0], sizes = [8, 1, 128], strides = [1, 1, 1]} : vector<8x8x128xf32> to vector<8x1x128xf32>
    %146 = vector.shape_cast %145 : vector<8x1x128xf32> to vector<8x128xf32>
    %147 = arith.truncf %144 : vector<8x32xf32> to vector<8x32xbf16>
    %cst_31 = arith.constant dense<0.000000e+00> : vector<8x128xf32>
    %148 = tpu.matmul %147, %0, %cst_31 {dimension_numbers = #tpu.dot_dimension_numbers<[1], [0], [0], [1], [0, 0, 1, 1], [], []>} : vector<8x32xbf16>, vector<32x128xbf16>, vector<8x128xf32> -> vector<8x128xf32>
    %149 = arith.addf %146, %148 : vector<8x128xf32>
    %150 = math.tanh %149 : vector<8x128xf32>
    %cst_32 = arith.constant 5.000000e-01 : f32
    %151 = vector.broadcast %cst_32 : f32 to vector<8x128xf32>
    %152 = arith.mulf %150, %151 : vector<8x128xf32>
    %cst_33 = arith.constant 5.000000e-01 : f32
    %153 = vector.broadcast %cst_33 : f32 to vector<8x128xf32>
    %154 = arith.addf %152, %153 : vector<8x128xf32>
    %155 = vector.extract_strided_slice %154 {offsets = [0, 0], sizes = [8, 32], strides = [1, 1]} : vector<8x128xf32> to vector<8x32xf32>
    %156 = vector.extract_strided_slice %154 {offsets = [0, 32], sizes = [8, 32], strides = [1, 1]} : vector<8x128xf32> to vector<8x32xf32>
    %157 = vector.extract_strided_slice %150 {offsets = [0, 64], sizes = [8, 32], strides = [1, 1]} : vector<8x128xf32> to vector<8x32xf32>
    %158 = vector.extract_strided_slice %154 {offsets = [0, 96], sizes = [8, 32], strides = [1, 1]} : vector<8x128xf32> to vector<8x32xf32>
    %159 = arith.mulf %156, %142 : vector<8x32xf32>
    %160 = arith.mulf %155, %157 : vector<8x32xf32>
    %161 = arith.addf %159, %160 : vector<8x32xf32>
    %162 = math.tanh %161 : vector<8x32xf32>
    %163 = arith.mulf %158, %162 : vector<8x32xf32>
    %c0_34 = arith.constant 0 : index
    %c0_35 = arith.constant 0 : index
    %164 = vector.load %arg4[%c0_34, %c0_35] : memref<1x32xf32, #tpu.memory_space<vmem>>, vector<1x32xf32>
    %165 = vector.broadcast %164 : vector<1x32xf32> to vector<8x32xf32>
    %166 = arith.mulf %163, %165 : vector<8x32xf32>
    %cst_36 = arith.constant dense<0.000000e+00> : vector<8xf32>
    %167 = vector.multi_reduction <add>, %166, %cst_36 [1] : vector<8x32xf32> to vector<8xf32>
    %168 = vector.shape_cast %167 : vector<8xf32> to vector<8x1xf32>
    %c0_37 = arith.constant 0 : index
    %c0_38 = arith.constant 0 : index
    %169 = vector.load %arg5[%c0_37, %c0_38] : memref<1x1xf32, #tpu.memory_space<vmem>>, vector<1x1xf32>
    %170 = vector.broadcast %169 : vector<1x1xf32> to vector<8x1xf32>
    %171 = arith.addf %168, %170 : vector<8x1xf32>
    %c0_39 = arith.constant 0 : index
    %c0_40 = arith.constant 0 : index
    %172 = vector.load %arg6[%c0_39, %c0_40] : memref<8x1xf32, #tpu.memory_space<vmem>>, vector<8x1xf32>
    tpu.vector_store %arg6[%c0_39, %c0_40], %171 {strides = array<i32>} : memref<8x1xf32, #tpu.memory_space<vmem>>, vector<8x1xf32>,
    return
  }
}

</mosaic_0001>

<llo_original>
// kernel: tpu_custom_call.1
$region0: #{tpu_custom_call.1}
  #allocation0 [shape = 'u32[]', space=smem, size = 0x4, offset = 0x4, fixed_abs, tag = 'smem constant byte address 0x4 - core index']
  #allocation1 [shape = 'u32[144,128]{1,0:T(1,128)}', space=vmem, size = 0x12000, scoped, tag = 'internal scratch']
  #allocation2 [shape = 'f32[1,1]{1,0:T(1,128)S(1)}', space=vmem, size = 0x200, scoped, tag = 'scoped memory for tpu_custom_call.1']
  %s0 = inlined_call_operand.hbm [shape: f32[8,8,16], index: 0, kind: input, shape index: {}]
  %s1 = inlined_call_operand.hbm [shape: bf16[16,128], index: 1, kind: input, shape index: {}]
  %s2 = inlined_call_operand.hbm [shape: bf16[32,128], index: 2, kind: input, shape index: {}]
  %s3 = inlined_call_operand.vmem [shape: f32[1,128], index: 3, kind: input, shape index: {}]
  %s4 = inlined_call_operand.vmem [shape: f32[1,32], index: 4, kind: input, shape index: {}]
  %s5 = inlined_call_operand.<no memory space> [shape: f32[1,1], index: 5, kind: input, shape index: {}]
  %s6 = inlined_call_operand.vmem [shape: f32[8,1], index: 6, kind: output, shape index: {}]
  %s7 = sld [smem:[#allocation0]]
  $region46: #{tpu_custom_call.1} parent=0
    _
  %s9 = ssub.s32 1, %s7
  %s10 = scalar_select 0, %s9, %s7
  %v11 = vstv %s5
  %12 = vst [vmem:[#allocation2] sm:$0x1] %v11
  $region1: #{tpu_custom_call.1} parent=0
    #allocation3 [shape = 'u8[32768]{0}', space=vmem, size = 0x8000, scoped, tag = 'input window, operand 0, single buffered']
    #allocation4 [shape = 's32[1]{0}', space=sflag, size = 0x4, scoped, tag = 'scoped memory for tpu_custom_call.1']
    #allocation5 [shape = 'u8[4096]{0}', space=vmem, size = 0x1000, scoped, tag = 'input window, operand 1, single buffered']
    #allocation6 [shape = 's32[1]{0}', space=sflag, size = 0x4, scoped, tag = 'scoped memory for tpu_custom_call.1']
    #allocation7 [shape = 'u8[8192]{0}', space=vmem, size = 0x2000, scoped, tag = 'input window, operand 2, single buffered']
    %13 = vsyncpa [#allocation4], 0
    %14 = vsyncpa [#allocation6], 0
    // Predicated region
    $region2: #{tpu_custom_call.1} parent=1 // pred_check
      _
    $region3: #{tpu_custom_call.1} parent=1 // pred_check_branch
      %16 = sbr.rel (0) target = $region5
    $region4: #{tpu_custom_call.1} parent=1 // pred_region
      %s18 = ssub.s32 1024, 1024
      %19 = vsyncadd [#allocation4], %s18
      %s20 = sshll.u32 [#allocation3], 4
      %s21 = int_to_ptr.vmem [resolvable:$true] %s20
      %26 = dma.hbm_to_vmem [thread:$0]  %s0, 1024, %s21, [#allocation4], 128, 128, 8
    $region5: #{tpu_custom_call.1} parent=1 // pred_fallthru
      _
    // Predicated region
    $region6: #{tpu_custom_call.1} parent=1 // pred_check
      _
    $region7: #{tpu_custom_call.1} parent=1 // pred_check_branch
      %28 = sbr.rel (0) target = $region9
    $region8: #{tpu_custom_call.1} parent=1 // pred_region
      %s30 = ssub.s32 128, 128
      %31 = vsyncadd [#allocation6], %s30
      %s32 = sshll.u32 [#allocation5], 4
      %s33 = int_to_ptr.vmem [resolvable:$true] %s32
      %38 = dma.hbm_to_vmem [thread:$0]  %s1, 128, %s33, [#allocation6], 64, 64, 4
    $region9: #{tpu_custom_call.1} parent=1 // pred_fallthru
      _
    // Predicated region
    $region10: #{tpu_custom_call.1} parent=1 // pred_check
      _
    $region11: #{tpu_custom_call.1} parent=1 // pred_check_branch
      %40 = sbr.rel (0) target = $region13
    $region12: #{tpu_custom_call.1} parent=1 // pred_region
      %s42 = ssub.s32 256, 256
      %43 = vsyncadd [#allocation6], %s42
      %s44 = sshll.u32 [#allocation7], 4
      %s45 = int_to_ptr.vmem [resolvable:$true] %s44
      %50 = dma.hbm_to_vmem [thread:$0]  %s2, 256, %s45, [#allocation6], 64, 64, 4
    $region13: #{tpu_custom_call.1} parent=1 // pred_fallthru
      _
    // Predicated region
    $region14: #{tpu_custom_call.1} parent=1 // pred_check
      _
    $region15: #{tpu_custom_call.1} parent=1 // pred_check_branch
      %52 = sbr.rel (0) target = $region17
    $region16: #{tpu_custom_call.1} parent=1 // pred_region
      _
    $region17: #{tpu_custom_call.1} parent=1 // pred_fallthru
      _
    // Predicated region
    $region18: #{tpu_custom_call.1} parent=1 // pred_check
      _
    $region19: #{tpu_custom_call.1} parent=1 // pred_check_branch
      %54 = sbr.rel (0) target = $region21
    $region20: #{tpu_custom_call.1} parent=1 // pred_region
      _
    $region21: #{tpu_custom_call.1} parent=1 // pred_fallthru
      _
    // Predicated region
    $region22: #{tpu_custom_call.1} parent=1 // pred_check
      _
    $region23: #{tpu_custom_call.1} parent=1 // pred_check_branch
      %56 = sbr.rel (0) target = $region25
    $region24: #{tpu_custom_call.1} parent=1 // pred_region
      _
    $region25: #{tpu_custom_call.1} parent=1 // pred_fallthru
      _
    // Predicated region
    $region26: #{tpu_custom_call.1} parent=1 // pred_check
      _
    $region27: #{tpu_custom_call.1} parent=1 // pred_check_branch
      %58 = sbr.rel (0) target = $region29
    $region28: #{tpu_custom_call.1} parent=1 // pred_region
      %59 = dma.done [#allocation4], 1024
    $region29: #{tpu_custom_call.1} parent=1 // pred_fallthru
      _
    // Predicated region
    $region30: #{tpu_custom_call.1} parent=1 // pred_check
      _
    $region31: #{tpu_custom_call.1} parent=1 // pred_check_branch
      %61 = sbr.rel (0) target = $region33
    $region32: #{tpu_custom_call.1} parent=1 // pred_region
      %62 = dma.done [#allocation6], 128
    $region33: #{tpu_custom_call.1} parent=1 // pred_fallthru
      _
    // Predicated region
    $region34: #{tpu_custom_call.1} parent=1 // pred_check
      _
    $region35: #{tpu_custom_call.1} parent=1 // pred_check_branch
      %64 = sbr.rel (0) target = $region37
    $region36: #{tpu_custom_call.1} parent=1 // pred_region
      %65 = dma.done [#allocation6], 256
    $region37: #{tpu_custom_call.1} parent=1 // pred_fallthru
      _
    %v67 = vld [vmem:[#allocation7] sm:$0xf]
    %v68 = vld [vmem:[#allocation7 + $0x4] sm:$0xf]
    %v69 = vld [vmem:[#allocation7 + $0x8] sm:$0xf]
    %v70 = vld [vmem:[#allocation7 + $0xc] sm:$0xf]
    %v71 = vld [vmem:[%s3] sm:$0x1]
    %v72 = vld [vmem:[#allocation3] sm:$0xff]
    %v73 = vld [vmem:[#allocation3 + $0x8] sm:$0xff]
    %v74 = vld [vmem:[#allocation3 + $0x10] sm:$0xff]
    %v75 = vld [vmem:[#allocation3 + $0x18] sm:$0xff]
    %v76 = vld [vmem:[#allocation3 + $0x20] sm:$0xff]
    %v77 = vld [vmem:[#allocation3 + $0x28] sm:$0xff]
    %v78 = vld [vmem:[#allocation3 + $0x30] sm:$0xff]
    %v79 = vld [vmem:[#allocation3 + $0x38] sm:$0xff]
    %v80 = vpack.c.bf16 %v73, %v72
    %v81 = vpack.c.bf16 %v75, %v74
    %v82 = vpack.c.bf16 %v77, %v76
    %v83 = vpack.c.bf16 %v79, %v78
    %v84 = vld [vmem:[#allocation5] sm:$0xf]
    %v85 = vld [vmem:[#allocation5 + $0x4] sm:$0xf]
    %v87 = vlaneseq
    %v88 = vshrl.u32 %v87, 7
    %v89 = vsub.s32 0, %v88
    %v90 = vrot.slane %v71, %v89
    %v94 = vunpack.c.l.b16 %v84
    %v95 = vunpack.c.l.b16 %v85
    %v96 = vpack.c.b16 %v95, %v94
    %vm98 = vcmask 130048
    %v100 = vsel %vm98, %v80, 0
    %v103 = vsel %vm98, %v81, 0
    %v106 = vsel %vm98, %v82, 0
    %v109 = vsel %vm98, %v83, 0
    %111 = vmatprep.subr.bf16.mxu0 0
    %112 = vmatpush1.bf16.msra.mxu0 %v96
    %113 = vmatprep.subr.bf16.mxu0 0
    %114 = vmatpush1.bf16.msra.mxu0 0
    %115 = vmatprep.subr.bf16.mxu0 0
    %116 = vmatpush1.bf16.msra.mxu0 0
    %117 = vmatprep.subr.bf16.mxu0 0
    %118 = vmatpush1.bf16.msra.mxu0 0
    %119 = vmatprep.subr.bf16.mxu0 0
    %120 = vmatpush1.bf16.msra.mxu0 0
    %121 = vmatprep.subr.bf16.mxu0 0
    %122 = vmatpush1.bf16.msra.mxu0 0
    %123 = vmatprep.subr.bf16.mxu0 0
    %124 = vmatpush1.bf16.msra.mxu0 0
    %125 = vmatprep.subr.bf16.mxu0 0
    %126 = vmatpush1.bf16.msra.mxu0 0
    %127 = vmatprep.subr.bf16.mxu0 0
    %128 = vmatpush1.bf16.msra.mxu0 0
    %129 = vmatprep.subr.bf16.mxu0 0
    %130 = vmatpush1.bf16.msra.mxu0 0
    %131 = vmatprep.subr.bf16.mxu0 0
    %132 = vmatpush1.bf16.msra.mxu0 0
    %133 = vmatprep.subr.bf16.mxu0 0
    %134 = vmatpush1.bf16.msra.mxu0 0
    %135 = vmatprep.subr.bf16.mxu0 0
    %136 = vmatpush1.bf16.msra.mxu0 0
    %137 = vmatprep.subr.bf16.mxu0 0
    %138 = vmatpush1.bf16.msra.mxu0 0
    %139 = vmatprep.subr.bf16.mxu0 0
    %140 = vmatpush1.bf16.msra.mxu0 0
    %141 = vmatprep.subr.bf16.mxu0 0
    %142 = vmatpush1.bf16.msra.mxu0 0
    %143 = vmatprep.mubr.bf16.mxu0 0
    %144 = vmatmul.mubr.bf16.gmra.mrb[0].mxu0 %v100
    %v145 = vpop.f32.mrb[0].mxu0
    %v146 = vadd.f32 %v90, %v145
    %v147 = vpop.f32.mrb[0].mxu0
    %v148 = vpop.f32.mrb[0].mxu0
    %v149 = vadd.f32 %v90, %v148
    %v150 = vpop.f32.mrb[0].mxu0
    %151 = vmatprep.mubr.bf16.mxu0 0
    %152 = vmatmul.mubr.bf16.gmra.mrb[0].mxu0 %v103
    %v153 = vpop.f32.mrb[0].mxu0
    %v154 = vadd.f32 %v90, %v153
    %v155 = vpop.f32.mrb[0].mxu0
    %v156 = vpop.f32.mrb[0].mxu0
    %v157 = vadd.f32 %v90, %v156
    %v158 = vpop.f32.mrb[0].mxu0
    %159 = vmatprep.mubr.bf16.mxu0 0
    %160 = vmatmul.mubr.bf16.gmra.mrb[0].mxu0 %v106
    %v161 = vpop.f32.mrb[0].mxu0
    %v162 = vadd.f32 %v90, %v161
    %v163 = vpop.f32.mrb[0].mxu0
    %v164 = vpop.f32.mrb[0].mxu0
    %v165 = vadd.f32 %v90, %v164
    %v166 = vpop.f32.mrb[0].mxu0
    %167 = vmatprep.mubr.bf16.mxu0 0
    %168 = vmatmul.mubr.bf16.gmra.mrb[0].mxu0 %v109
    %v169 = vpop.f32.mrb[0].mxu0
    %v170 = vadd.f32 %v90, %v169
    %v171 = vpop.f32.mrb[0].mxu0
    %v172 = vpop.f32.mrb[0].mxu0
    %v173 = vadd.f32 %v90, %v172
    %v174 = vpop.f32.mrb[0].mxu0
    %175 = vdwg.mxu0
    %v180 = vunpack.c.l.b16 %v67
    %v181 = vunpack.c.l.b16 %v68
    %v182 = vunpack.c.l.b16 %v69
    %v183 = vunpack.c.l.b16 %v70
    %v184 = vpack.c.b16 %v181, %v180
    %v185 = vpack.c.b16 %v183, %v182
    %vm188 = vcmask 261120
    %v190 = vsel %vm188, 0, 0
    %192 = vmatprep.subr.bf16.mxu0 0
    %193 = vmatpush1.bf16.msra.mxu0 %v184
    %194 = vmatprep.subr.bf16.mxu0 0
    %195 = vmatpush1.bf16.msra.mxu0 %v185
    %196 = vmatprep.subr.bf16.mxu0 0
    %197 = vmatpush1.bf16.msra.mxu0 0
    %198 = vmatprep.subr.bf16.mxu0 0
    %199 = vmatpush1.bf16.msra.mxu0 0
    %200 = vmatprep.subr.bf16.mxu0 0
    %201 = vmatpush1.bf16.msra.mxu0 0
    %202 = vmatprep.subr.bf16.mxu0 0
    %203 = vmatpush1.bf16.msra.mxu0 0
    %204 = vmatprep.subr.bf16.mxu0 0
    %205 = vmatpush1.bf16.msra.mxu0 0
    %206 = vmatprep.subr.bf16.mxu0 0
    %207 = vmatpush1.bf16.msra.mxu0 0
    %208 = vmatprep.subr.bf16.mxu0 0
    %209 = vmatpush1.bf16.msra.mxu0 0
    %210 = vmatprep.subr.bf16.mxu0 0
    %211 = vmatpush1.bf16.msra.mxu0 0
    %212 = vmatprep.subr.bf16.mxu0 0
    %213 = vmatpush1.bf16.msra.mxu0 0
    %214 = vmatprep.subr.bf16.mxu0 0
    %215 = vmatpush1.bf16.msra.mxu0 0
    %216 = vmatprep.subr.bf16.mxu0 0
    %217 = vmatpush1.bf16.msra.mxu0 0
    %218 = vmatprep.subr.bf16.mxu0 0
    %219 = vmatpush1.bf16.msra.mxu0 0
    %220 = vmatprep.subr.bf16.mxu0 0
    %221 = vmatpush1.bf16.msra.mxu0 0
    %222 = vmatprep.subr.bf16.mxu0 0
    %223 = vmatpush1.bf16.msra.mxu0 0
    %224 = vmatprep.mubr.bf16.mxu0 0
    %225 = vmatmul.mubr.bf16.gmra.mrb[0].mxu0 %v190
    %v226 = vpop.f32.mrb[0].mxu0
    %v227 = vadd.f32 0.0, %v226
    %v228 = vpop.f32.mrb[0].mxu0
    %v229 = vpop.f32.mrb[0].mxu0
    %v230 = vpop.f32.mrb[0].mxu0
    %231 = vdwg.mxu0
    %v233 = vrot.slane %v227, 1
    %v234 = vrot.slane %v227, 2
    %v235 = vrot.slane %v227, 3
    %v236 = vrot.slane %v227, 4
    %v237 = vrot.slane %v227, 5
    %v238 = vrot.slane %v227, 6
    %v239 = vrot.slane %v227, 7
    %v248 = vadd.f32 %v146, %v227
    %v249 = vadd.f32 %v149, %v233
    %v250 = vadd.f32 %v154, %v234
    %v251 = vadd.f32 %v157, %v235
    %v252 = vadd.f32 %v162, %v236
    %v253 = vadd.f32 %v165, %v237
    %v254 = vadd.f32 %v170, %v238
    %v255 = vadd.f32 %v173, %v239
    %v256 = vtanh.pop %v248
    %v257 = vtanh.pop %v249
    %v258 = vtanh.pop %v250
    %v259 = vtanh.pop %v251
    %v260 = vtanh.pop %v252
    %v261 = vtanh.pop %v253
    %v262 = vtanh.pop %v254
    %v263 = vtanh.pop %v255
    %v264 = vmul.f32 %v256, 0.5
    %v265 = vmul.f32 %v257, 0.5
    %v266 = vmul.f32 %v258, 0.5
    %v267 = vmul.f32 %v259, 0.5
    %v268 = vmul.f32 %v260, 0.5
    %v269 = vmul.f32 %v261, 0.5
    %v270 = vmul.f32 %v262, 0.5
    %v271 = vmul.f32 %v263, 0.5
    %v272 = vadd.f32 %v264, 0.5
    %v273 = vadd.f32 %v265, 0.5
    %v274 = vadd.f32 %v266, 0.5
    %v275 = vadd.f32 %v267, 0.5
    %v276 = vadd.f32 %v268, 0.5
    %v277 = vadd.f32 %v269, 0.5
    %v278 = vadd.f32 %v270, 0.5
    %v279 = vadd.f32 %v271, 0.5
    %v280 = vmul.f32 %v272, 0.0
    %v281 = vmul.f32 %v273, 0.0
    %v282 = vmul.f32 %v274, 0.0
    %v283 = vmul.f32 %v275, 0.0
    %v284 = vmul.f32 %v276, 0.0
    %v285 = vmul.f32 %v277, 0.0
    %v286 = vmul.f32 %v278, 0.0
    %v287 = vmul.f32 %v279, 0.0
    %296 = vrot.lane.b32.xlu0 %v256, 64
    %v297 = vpop.permute.xlu0 %296
    %298 = vrot.lane.b32.xlu0 %v257, 64
    %v299 = vpop.permute.xlu0 %298
    %300 = vrot.lane.b32.xlu0 %v258, 64
    %v301 = vpop.permute.xlu0 %300
    %302 = vrot.lane.b32.xlu0 %v259, 64
    %v303 = vpop.permute.xlu0 %302
    %304 = vrot.lane.b32.xlu0 %v260, 64
    %v305 = vpop.permute.xlu0 %304
    %306 = vrot.lane.b32.xlu0 %v261, 64
    %v307 = vpop.permute.xlu0 %306
    %308 = vrot.lane.b32.xlu0 %v262, 64
    %v309 = vpop.permute.xlu0 %308
    %310 = vrot.lane.b32.xlu0 %v263, 64
    %v311 = vpop.permute.xlu0 %310
    %v320 = vmul.f32 %v272, %v297
    %v321 = vmul.f32 %v273, %v299
    %v322 = vmul.f32 %v274, %v301
    %v323 = vmul.f32 %v275, %v303
    %v324 = vmul.f32 %v276, %v305
    %v325 = vmul.f32 %v277, %v307
    %v326 = vmul.f32 %v278, %v309
    %v327 = vmul.f32 %v279, %v311
    %336 = vrot.lane.b32.xlu0 %v320, 32
    %v337 = vpop.permute.xlu0 %336
    %338 = vrot.lane.b32.xlu0 %v321, 32
    %v339 = vpop.permute.xlu0 %338
    %340 = vrot.lane.b32.xlu0 %v322, 32
    %v341 = vpop.permute.xlu0 %340
    %342 = vrot.lane.b32.xlu0 %v323, 32
    %v343 = vpop.permute.xlu0 %342
    %344 = vrot.lane.b32.xlu0 %v324, 32
    %v345 = vpop.permute.xlu0 %344
    %346 = vrot.lane.b32.xlu0 %v325, 32
    %v347 = vpop.permute.xlu0 %346
    %348 = vrot.lane.b32.xlu0 %v326, 32
    %v349 = vpop.permute.xlu0 %348
    %350 = vrot.lane.b32.xlu0 %v327, 32
    %v351 = vpop.permute.xlu0 %350
    %v360 = vadd.f32 %v280, %v337
    %v361 = vadd.f32 %v281, %v339
    %v362 = vadd.f32 %v282, %v341
    %v363 = vadd.f32 %v283, %v343
    %v364 = vadd.f32 %v284, %v345
    %v365 = vadd.f32 %v285, %v347
    %v366 = vadd.f32 %v286, %v349
    %v367 = vadd.f32 %v287, %v351
    %v368 = vtanh.pop %v360
    %v369 = vtanh.pop %v361
    %v370 = vtanh.pop %v362
    %v371 = vtanh.pop %v363
    %v372 = vtanh.pop %v364
    %v373 = vtanh.pop %v365
    %v374 = vtanh.pop %v366
    %v375 = vtanh.pop %v367
    %384 = vrot.lane.b32.xlu0 %v368, 64
    %v385 = vpop.permute.xlu0 %384
    %386 = vrot.lane.b32.xlu0 %v369, 64
    %v387 = vpop.permute.xlu0 %386
    %388 = vrot.lane.b32.xlu0 %v370, 64
    %v389 = vpop.permute.xlu0 %388
    %390 = vrot.lane.b32.xlu0 %v371, 64
    %v391 = vpop.permute.xlu0 %390
    %392 = vrot.lane.b32.xlu0 %v372, 64
    %v393 = vpop.permute.xlu0 %392
    %394 = vrot.lane.b32.xlu0 %v373, 64
    %v395 = vpop.permute.xlu0 %394
    %396 = vrot.lane.b32.xlu0 %v374, 64
    %v397 = vpop.permute.xlu0 %396
    %398 = vrot.lane.b32.xlu0 %v375, 64
    %v399 = vpop.permute.xlu0 %398
    %v408 = vmul.f32 %v272, %v385
    %v409 = vmul.f32 %v273, %v387
    %v410 = vmul.f32 %v274, %v389
    %v411 = vmul.f32 %v275, %v391
    %v412 = vmul.f32 %v276, %v393
    %v413 = vmul.f32 %v277, %v395
    %v414 = vmul.f32 %v278, %v397
    %v415 = vmul.f32 %v279, %v399
    %v416 = vpack.c.bf16 %v408, %v408
    %v417 = vpack.c.bf16 %v409, %v409
    %v418 = vpack.c.bf16 %v410, %v410
    %v419 = vpack.c.bf16 %v411, %v411
    %v420 = vpack.c.bf16 %v412, %v412
    %v421 = vpack.c.bf16 %v413, %v413
    %v422 = vpack.c.bf16 %v414, %v414
    %v423 = vpack.c.bf16 %v415, %v415
    %v432 = vunpack.c.l.b16 %v416
    %v433 = vunpack.c.l.b16 %v417
    %v434 = vunpack.c.l.b16 %v418
    %v435 = vunpack.c.l.b16 %v419
    %v436 = vunpack.c.l.b16 %v420
    %v437 = vunpack.c.l.b16 %v421
    %v438 = vunpack.c.l.b16 %v422
    %v439 = vunpack.c.l.b16 %v423
    %v440 = vrot.slane %v433, 7
    %vm441 = vcmask 1041409
    %v442 = vsel %vm441, %v440, %v432
    %v443 = vrot.slane %v434, 6
    %vm444 = vcmask 1042434
    %v445 = vsel %vm444, %v443, %v442
    %v446 = vrot.slane %v435, 5
    %vm447 = vcmask 1043459
    %v448 = vsel %vm447, %v446, %v445
    %v449 = vrot.slane %v436, 4
    %vm450 = vcmask 1044484
    %v451 = vsel %vm450, %v449, %v448
    %v452 = vrot.slane %v437, 3
    %vm453 = vcmask 1045509
    %v454 = vsel %vm453, %v452, %v451
    %v455 = vrot.slane %v438, 2
    %vm456 = vcmask 1046534
    %v457 = vsel %vm456, %v455, %v454
    %v458 = vrot.slane %v439, 1
    %vm459 = vcmask 1047559
    %v460 = vsel %vm459, %v458, %v457
    %v461 = vpack.c.b16 %v460, %v460
    %462 = vrot.lane.b32.xlu0 %v461, 32
    %v463 = vpop.permute.xlu0 %462
    %v465 = vsel %vm188, %v463, 0
    %467 = vmatprep.subr.bf16.mxu0 0
    %468 = vmatpush1.bf16.msra.mxu0 %v184
    %469 = vmatprep.subr.bf16.mxu0 0
    %470 = vmatpush1.bf16.msra.mxu0 %v185
    %471 = vmatprep.subr.bf16.mxu0 0
    %472 = vmatpush1.bf16.msra.mxu0 0
    %473 = vmatprep.subr.bf16.mxu0 0
    %474 = vmatpush1.bf16.msra.mxu0 0
    %475 = vmatprep.subr.bf16.mxu0 0
    %476 = vmatpush1.bf16.msra.mxu0 0
    %477 = vmatprep.subr.bf16.mxu0 0
    %478 = vmatpush1.bf16.msra.mxu0 0
    %479 = vmatprep.subr.bf16.mxu0 0
    %480 = vmatpush1.bf16.msra.mxu0 0
    %481 = vmatprep.subr.bf16.mxu0 0
    %482 = vmatpush1.bf16.msra.mxu0 0
    %483 = vmatprep.subr.bf16.mxu0 0
    %484 = vmatpush1.bf16.msra.mxu0 0
    %485 = vmatprep.subr.bf16.mxu0 0
    %486 = vmatpush1.bf16.msra.mxu0 0
    %487 = vmatprep.subr.bf16.mxu0 0
    %488 = vmatpush1.bf16.msra.mxu0 0
    %489 = vmatprep.subr.bf16.mxu0 0
    %490 = vmatpush1.bf16.msra.mxu0 0
    %491 = vmatprep.subr.bf16.mxu0 0
    %492 = vmatpush1.bf16.msra.mxu0 0
    %493 = vmatprep.subr.bf16.mxu0 0
    %494 = vmatpush1.bf16.msra.mxu0 0
    %495 = vmatprep.subr.bf16.mxu0 0
    %496 = vmatpush1.bf16.msra.mxu0 0
    %497 = vmatprep.subr.bf16.mxu0 0
    %498 = vmatpush1.bf16.msra.mxu0 0
    %499 = vmatprep.mubr.bf16.mxu0 0
    %500 = vmatmul.mubr.bf16.gmra.mrb[0].mxu0 %v465
    %v501 = vpop.f32.mrb[0].mxu0
    %v502 = vadd.f32 0.0, %v501
    %v503 = vpop.f32.mrb[0].mxu0
    %v504 = vpop.f32.mrb[0].mxu0
    %v505 = vpop.f32.mrb[0].mxu0
    %506 = vdwg.mxu0
    %v508 = vrot.slane %v502, 7
    %v509 = vrot.slane %v502, 1
    %v510 = vrot.slane %v502, 2
    %v511 = vrot.slane %v502, 3
    %v512 = vrot.slane %v502, 4
    %v513 = vrot.slane %v502, 5
    %v514 = vrot.slane %v502, 6
    %v523 = vadd.f32 %v146, %v508
    %v524 = vadd.f32 %v149, %v502
    %v525 = vadd.f32 %v154, %v509
    %v526 = vadd.f32 %v157, %v510
    %v527 = vadd.f32 %v162, %v511
    %v528 = vadd.f32 %v165, %v512
    %v529 = vadd.f32 %v170, %v513
    %v530 = vadd.f32 %v173, %v514
    %v531 = vtanh.pop %v523
    %v532 = vtanh.pop %v524
    %v533 = vtanh.pop %v525
    %v534 = vtanh.pop %v526
    %v535 = vtanh.pop %v527
    %v536 = vtanh.pop %v528
    %v537 = vtanh.pop %v529
    %v538 = vtanh.pop %v530
    %v539 = vmul.f32 %v531, 0.5
    %v540 = vmul.f32 %v532, 0.5
    %v541 = vmul.f32 %v533, 0.5
    %v542 = vmul.f32 %v534, 0.5
    %v543 = vmul.f32 %v535, 0.5
    %v544 = vmul.f32 %v536, 0.5
    %v545 = vmul.f32 %v537, 0.5
    %v546 = vmul.f32 %v538, 0.5
    %v547 = vadd.f32 %v539, 0.5
    %v548 = vadd.f32 %v540, 0.5
    %v549 = vadd.f32 %v541, 0.5
    %v550 = vadd.f32 %v542, 0.5
    %v551 = vadd.f32 %v543, 0.5
    %v552 = vadd.f32 %v544, 0.5
    %v553 = vadd.f32 %v545, 0.5
    %v554 = vadd.f32 %v546, 0.5
    %v563 = vrot.slane %v360, 7
    %v564 = vrot.slane %v361, 7
    %v565 = vrot.slane %v362, 7
    %v566 = vrot.slane %v363, 7
    %v567 = vrot.slane %v364, 7
    %v568 = vrot.slane %v365, 7
    %v569 = vrot.slane %v366, 7
    %v570 = vrot.slane %v367, 7
    %v579 = vmul.f32 %v547, %v563
    %v580 = vmul.f32 %v548, %v564
    %v581 = vmul.f32 %v549, %v565
    %v582 = vmul.f32 %v550, %v566
    %v583 = vmul.f32 %v551, %v567
    %v584 = vmul.f32 %v552, %v568
    %v585 = vmul.f32 %v553, %v569
    %v586 = vmul.f32 %v554, %v570
    %595 = vrot.lane.b32.xlu0 %v531, 64
    %v596 = vpop.permute.xlu0 %595
    %597 = vrot.lane.b32.xlu0 %v532, 64
    %v598 = vpop.permute.xlu0 %597
    %599 = vrot.lane.b32.xlu0 %v533, 64
    %v600 = vpop.permute.xlu0 %599
    %601 = vrot.lane.b32.xlu0 %v534, 64
    %v602 = vpop.permute.xlu0 %601
    %603 = vrot.lane.b32.xlu0 %v535, 64
    %v604 = vpop.permute.xlu0 %603
    %605 = vrot.lane.b32.xlu0 %v536, 64
    %v606 = vpop.permute.xlu0 %605
    %607 = vrot.lane.b32.xlu0 %v537, 64
    %v608 = vpop.permute.xlu0 %607
    %609 = vrot.lane.b32.xlu0 %v538, 64
    %v610 = vpop.permute.xlu0 %609
    %v619 = vmul.f32 %v547, %v596
    %v620 = vmul.f32 %v548, %v598
    %v621 = vmul.f32 %v549, %v600
    %v622 = vmul.f32 %v550, %v602
    %v623 = vmul.f32 %v551, %v604
    %v624 = vmul.f32 %v552, %v606
    %v625 = vmul.f32 %v553, %v608
    %v626 = vmul.f32 %v554, %v610
    %635 = vrot.lane.b32.xlu0 %v619, 32
    %v636 = vpop.permute.xlu0 %635
    %637 = vrot.lane.b32.xlu0 %v620, 32
    %v638 = vpop.permute.xlu0 %637
    %639 = vrot.lane.b32.xlu0 %v621, 32
    %v640 = vpop.permute.xlu0 %639
    %641 = vrot.lane.b32.xlu0 %v622, 32
    %v642 = vpop.permute.xlu0 %641
    %643 = vrot.lane.b32.xlu0 %v623, 32
    %v644 = vpop.permute.xlu0 %643
    %645 = vrot.lane.b32.xlu0 %v624, 32
    %v646 = vpop.permute.xlu0 %645
    %647 = vrot.lane.b32.xlu0 %v625, 32
    %v648 = vpop.permute.xlu0 %647
    %649 = vrot.lane.b32.xlu0 %v626, 32
    %v650 = vpop.permute.xlu0 %649
    %v659 = vadd.f32 %v579, %v636
    %v660 = vadd.f32 %v580, %v638
    %v661 = vadd.f32 %v581, %v640
    %v662 = vadd.f32 %v582, %v642
    %v663 = vadd.f32 %v583, %v644
    %v664 = vadd.f32 %v584, %v646
    %v665 = vadd.f32 %v585, %v648
    %v666 = vadd.f32 %v586, %v650
    %v667 = vtanh.pop %v659
    %v668 = vtanh.pop %v660
    %v669 = vtanh.pop %v661
    %v670 = vtanh.pop %v662
    %v671 = vtanh.pop %v663
    %v672 = vtanh.pop %v664
    %v673 = vtanh.pop %v665
    %v674 = vtanh.pop %v666
    %683 = vrot.lane.b32.xlu0 %v667, 64
    %v684 = vpop.permute.xlu0 %683
    %685 = vrot.lane.b32.xlu0 %v668, 64
    %v686 = vpop.permute.xlu0 %685
    %687 = vrot.lane.b32.xlu0 %v669, 64
    %v688 = vpop.permute.xlu0 %687
    %689 = vrot.lane.b32.xlu0 %v670, 64
    %v690 = vpop.permute.xlu0 %689
    %691 = vrot.lane.b32.xlu0 %v671, 64
    %v692 = vpop.permute.xlu0 %691
    %693 = vrot.lane.b32.xlu0 %v672, 64
    %v694 = vpop.permute.xlu0 %693
    %695 = vrot.lane.b32.xlu0 %v673, 64
    %v696 = vpop.permute.xlu0 %695
    %697 = vrot.lane.b32.xlu0 %v674, 64
    %v698 = vpop.permute.xlu0 %697
    %v707 = vmul.f32 %v547, %v684
    %v708 = vmul.f32 %v548, %v686
    %v709 = vmul.f32 %v549, %v688
    %v710 = vmul.f32 %v550, %v690
    %v711 = vmul.f32 %v551, %v692
    %v712 = vmul.f32 %v552, %v694
    %v713 = vmul.f32 %v553, %v696
    %v714 = vmul.f32 %v554, %v698
    %v715 = vpack.c.bf16 %v707, %v707
    %v716 = vpack.c.bf16 %v708, %v708
    %v717 = vpack.c.bf16 %v709, %v709
    %v718 = vpack.c.bf16 %v710, %v710
    %v719 = vpack.c.bf16 %v711, %v711
    %v720 = vpack.c.bf16 %v712, %v712
    %v721 = vpack.c.bf16 %v713, %v713
    %v722 = vpack.c.bf16 %v714, %v714
    %v731 = vunpack.c.l.b16 %v715
    %v732 = vunpack.c.l.b16 %v716
    %v733 = vunpack.c.l.b16 %v717
    %v734 = vunpack.c.l.b16 %v718
    %v735 = vunpack.c.l.b16 %v719
    %v736 = vunpack.c.l.b16 %v720
    %v737 = vunpack.c.l.b16 %v721
    %v738 = vunpack.c.l.b16 %v722
    %v739 = vrot.slane %v731, 1
    %v740 = vsel %vm441, %v732, %v739
    %v741 = vrot.slane %v733, 7
    %v742 = vsel %vm444, %v741, %v740
    %v743 = vrot.slane %v734, 6
    %v744 = vsel %vm447, %v743, %v742
    %v745 = vrot.slane %v735, 5
    %v746 = vsel %vm450, %v745, %v744
    %v747 = vrot.slane %v736, 4
    %v748 = vsel %vm453, %v747, %v746
    %v749 = vrot.slane %v737, 3
    %v750 = vsel %vm456, %v749, %v748
    %v751 = vrot.slane %v738, 2
    %v752 = vsel %vm459, %v751, %v750
    %v753 = vpack.c.b16 %v752, %v752
    %754 = vrot.lane.b32.xlu0 %v753, 32
    %v755 = vpop.permute.xlu0 %754
    %v757 = vsel %vm188, %v755, 0
    %759 = vmatprep.subr.bf16.mxu0 0
    %760 = vmatpush1.bf16.msra.mxu0 %v184
    %761 = vmatprep.subr.bf16.mxu0 0
    %762 = vmatpush1.bf16.msra.mxu0 %v185
    %763 = vmatprep.subr.bf16.mxu0 0
    %764 = vmatpush1.bf16.msra.mxu0 0
    %765 = vmatprep.subr.bf16.mxu0 0
    %766 = vmatpush1.bf16.msra.mxu0 0
    %767 = vmatprep.subr.bf16.mxu0 0
    %768 = vmatpush1.bf16.msra.mxu0 0
    %769 = vmatprep.subr.bf16.mxu0 0
    %770 = vmatpush1.bf16.msra.mxu0 0
    %771 = vmatprep.subr.bf16.mxu0 0
    %772 = vmatpush1.bf16.msra.mxu0 0
    %773 = vmatprep.subr.bf16.mxu0 0
    %774 = vmatpush1.bf16.msra.mxu0 0
    %775 = vmatprep.subr.bf16.mxu0 0
    %776 = vmatpush1.bf16.msra.mxu0 0
    %777 = vmatprep.subr.bf16.mxu0 0
    %778 = vmatpush1.bf16.msra.mxu0 0
    %779 = vmatprep.subr.bf16.mxu0 0
    %780 = vmatpush1.bf16.msra.mxu0 0
    %781 = vmatprep.subr.bf16.mxu0 0
    %782 = vmatpush1.bf16.msra.mxu0 0
    %783 = vmatprep.subr.bf16.mxu0 0
    %784 = vmatpush1.bf16.msra.mxu0 0
    %785 = vmatprep.subr.bf16.mxu0 0
    %786 = vmatpush1.bf16.msra.mxu0 0
    %787 = vmatprep.subr.bf16.mxu0 0
    %788 = vmatpush1.bf16.msra.mxu0 0
    %789 = vmatprep.subr.bf16.mxu0 0
    %790 = vmatpush1.bf16.msra.mxu0 0
    %791 = vmatprep.mubr.bf16.mxu0 0
    %792 = vmatmul.mubr.bf16.gmra.mrb[0].mxu0 %v757
    %v793 = vpop.f32.mrb[0].mxu0
    %v794 = vadd.f32 0.0, %v793
    %v795 = vpop.f32.mrb[0].mxu0
    %v796 = vpop.f32.mrb[0].mxu0
    %v797 = vpop.f32.mrb[0].mxu0
    %798 = vdwg.mxu0
    %v800 = vrot.slane %v794, 6
    %v801 = vrot.slane %v794, 7
    %v802 = vrot.slane %v794, 1
    %v803 = vrot.slane %v794, 2
    %v804 = vrot.slane %v794, 3
    %v805 = vrot.slane %v794, 4
    %v806 = vrot.slane %v794, 5
    %v815 = vadd.f32 %v146, %v800
    %v816 = vadd.f32 %v149, %v801
    %v817 = vadd.f32 %v154, %v794
    %v818 = vadd.f32 %v157, %v802
    %v819 = vadd.f32 %v162, %v803
    %v820 = vadd.f32 %v165, %v804
    %v821 = vadd.f32 %v170, %v805
    %v822 = vadd.f32 %v173, %v806
    %v823 = vtanh.pop %v815
    %v824 = vtanh.pop %v816
    %v825 = vtanh.pop %v817
    %v826 = vtanh.pop %v818
    %v827 = vtanh.pop %v819
    %v828 = vtanh.pop %v820
    %v829 = vtanh.pop %v821
    %v830 = vtanh.pop %v822
    %v831 = vmul.f32 %v823, 0.5
    %v832 = vmul.f32 %v824, 0.5
    %v833 = vmul.f32 %v825, 0.5
    %v834 = vmul.f32 %v826, 0.5
    %v835 = vmul.f32 %v827, 0.5
    %v836 = vmul.f32 %v828, 0.5
    %v837 = vmul.f32 %v829, 0.5
    %v838 = vmul.f32 %v830, 0.5
    %v839 = vadd.f32 %v831, 0.5
    %v840 = vadd.f32 %v832, 0.5
    %v841 = vadd.f32 %v833, 0.5
    %v842 = vadd.f32 %v834, 0.5
    %v843 = vadd.f32 %v835, 0.5
    %v844 = vadd.f32 %v836, 0.5
    %v845 = vadd.f32 %v837, 0.5
    %v846 = vadd.f32 %v838, 0.5
    %v855 = vrot.slane %v659, 7
    %v856 = vrot.slane %v660, 7
    %v857 = vrot.slane %v661, 7
    %v858 = vrot.slane %v662, 7
    %v859 = vrot.slane %v663, 7
    %v860 = vrot.slane %v664, 7
    %v861 = vrot.slane %v665, 7
    %v862 = vrot.slane %v666, 7
    %v871 = vmul.f32 %v839, %v855
    %v872 = vmul.f32 %v840, %v856
    %v873 = vmul.f32 %v841, %v857
    %v874 = vmul.f32 %v842, %v858
    %v875 = vmul.f32 %v843, %v859
    %v876 = vmul.f32 %v844, %v860
    %v877 = vmul.f32 %v845, %v861
    %v878 = vmul.f32 %v846, %v862
    %887 = vrot.lane.b32.xlu0 %v823, 64
    %v888 = vpop.permute.xlu0 %887
    %889 = vrot.lane.b32.xlu0 %v824, 64
    %v890 = vpop.permute.xlu0 %889
    %891 = vrot.lane.b32.xlu0 %v825, 64
    %v892 = vpop.permute.xlu0 %891
    %893 = vrot.lane.b32.xlu0 %v826, 64
    %v894 = vpop.permute.xlu0 %893
    %895 = vrot.lane.b32.xlu0 %v827, 64
    %v896 = vpop.permute.xlu0 %895
    %897 = vrot.lane.b32.xlu0 %v828, 64
    %v898 = vpop.permute.xlu0 %897
    %899 = vrot.lane.b32.xlu0 %v829, 64
    %v900 = vpop.permute.xlu0 %899
    %901 = vrot.lane.b32.xlu0 %v830, 64
    %v902 = vpop.permute.xlu0 %901
    %v911 = vmul.f32 %v839, %v888
    %v912 = vmul.f32 %v840, %v890
    %v913 = vmul.f32 %v841, %v892
    %v914 = vmul.f32 %v842, %v894
    %v915 = vmul.f32 %v843, %v896
    %v916 = vmul.f32 %v844, %v898
    %v917 = vmul.f32 %v845, %v900
    %v918 = vmul.f32 %v846, %v902
    %927 = vrot.lane.b32.xlu0 %v911, 32
    %v928 = vpop.permute.xlu0 %927
    %929 = vrot.lane.b32.xlu0 %v912, 32
    %v930 = vpop.permute.xlu0 %929
    %931 = vrot.lane.b32.xlu0 %v913, 32
    %v932 = vpop.permute.xlu0 %931
    %933 = vrot.lane.b32.xlu0 %v914, 32
    %v934 = vpop.permute.xlu0 %933
    %935 = vrot.lane.b32.xlu0 %v915, 32
    %v936 = vpop.permute.xlu0 %935
    %937 = vrot.lane.b32.xlu0 %v916, 32
    %v938 = vpop.permute.xlu0 %937
    %939 = vrot.lane.b32.xlu0 %v917, 32
    %v940 = vpop.permute.xlu0 %939
    %941 = vrot.lane.b32.xlu0 %v918, 32
    %v942 = vpop.permute.xlu0 %941
    %v951 = vadd.f32 %v871, %v928
    %v952 = vadd.f32 %v872, %v930
    %v953 = vadd.f32 %v873, %v932
    %v954 = vadd.f32 %v874, %v934
    %v955 = vadd.f32 %v875, %v936
    %v956 = vadd.f32 %v876, %v938
    %v957 = vadd.f32 %v877, %v940
    %v958 = vadd.f32 %v878, %v942
    %v959 = vtanh.pop %v951
    %v960 = vtanh.pop %v952
    %v961 = vtanh.pop %v953
    %v962 = vtanh.pop %v954
    %v963 = vtanh.pop %v955
    %v964 = vtanh.pop %v956
    %v965 = vtanh.pop %v957
    %v966 = vtanh.pop %v958
    %975 = vrot.lane.b32.xlu0 %v959, 64
    %v976 = vpop.permute.xlu0 %975
    %977 = vrot.lane.b32.xlu0 %v960, 64
    %v978 = vpop.permute.xlu0 %977
    %979 = vrot.lane.b32.xlu0 %v961, 64
    %v980 = vpop.permute.xlu0 %979
    %981 = vrot.lane.b32.xlu0 %v962, 64
    %v982 = vpop.permute.xlu0 %981
    %983 = vrot.lane.b32.xlu0 %v963, 64
    %v984 = vpop.permute.xlu0 %983
    %985 = vrot.lane.b32.xlu0 %v964, 64
    %v986 = vpop.permute.xlu0 %985
    %987 = vrot.lane.b32.xlu0 %v965, 64
    %v988 = vpop.permute.xlu0 %987
    %989 = vrot.lane.b32.xlu0 %v966, 64
    %v990 = vpop.permute.xlu0 %989
    %v999 = vmul.f32 %v839, %v976
    %v1000 = vmul.f32 %v840, %v978
    %v1001 = vmul.f32 %v841, %v980
    %v1002 = vmul.f32 %v842, %v982
    %v1003 = vmul.f32 %v843, %v984
    %v1004 = vmul.f32 %v844, %v986
    %v1005 = vmul.f32 %v845, %v988
    %v1006 = vmul.f32 %v846, %v990
    %v1007 = vpack.c.bf16 %v999, %v999
    %v1008 = vpack.c.bf16 %v1000, %v1000
    %v1009 = vpack.c.bf16 %v1001, %v1001
    %v1010 = vpack.c.bf16 %v1002, %v1002
    %v1011 = vpack.c.bf16 %v1003, %v1003
    %v1012 = vpack.c.bf16 %v1004, %v1004
    %v1013 = vpack.c.bf16 %v1005, %v1005
    %v1014 = vpack.c.bf16 %v1006, %v1006
    %v1023 = vunpack.c.l.b16 %v1007
    %v1024 = vunpack.c.l.b16 %v1008
    %v1025 = vunpack.c.l.b16 %v1009
    %v1026 = vunpack.c.l.b16 %v1010
    %v1027 = vunpack.c.l.b16 %v1011
    %v1028 = vunpack.c.l.b16 %v1012
    %v1029 = vunpack.c.l.b16 %v1013
    %v1030 = vunpack.c.l.b16 %v1014
    %v1031 = vrot.slane %v1023, 2
    %v1032 = vrot.slane %v1024, 1
    %v1033 = vsel %vm441, %v1032, %v1031
    %v1034 = vsel %vm444, %v1025, %v1033
    %v1035 = vrot.slane %v1026, 7
    %v1036 = vsel %vm447, %v1035, %v1034
    %v1037 = vrot.slane %v1027, 6
    %v1038 = vsel %vm450, %v1037, %v1036
    %v1039 = vrot.slane %v1028, 5
    %v1040 = vsel %vm453, %v1039, %v1038
    %v1041 = vrot.slane %v1029, 4
    %v1042 = vsel %vm456, %v1041, %v1040
    %v1043 = vrot.slane %v1030, 3
    %v1044 = vsel %vm459, %v1043, %v1042
    %v1045 = vpack.c.b16 %v1044, %v1044
    %1046 = vrot.lane.b32.xlu0 %v1045, 32
    %v1047 = vpop.permute.xlu0 %1046
    %v1049 = vsel %vm188, %v1047, 0
    %1051 = vmatprep.subr.bf16.mxu0 0
    %1052 = vmatpush1.bf16.msra.mxu0 %v184
    %1053 = vmatprep.subr.bf16.mxu0 0
    %1054 = vmatpush1.bf16.msra.mxu0 %v185
    %1055 = vmatprep.subr.bf16.mxu0 0
    %1056 = vmatpush1.bf16.msra.mxu0 0
    %1057 = vmatprep.subr.bf16.mxu0 0
    %1058 = vmatpush1.bf16.msra.mxu0 0
    %1059 = vmatprep.subr.bf16.mxu0 0
    %1060 = vmatpush1.bf16.msra.mxu0 0
    %1061 = vmatprep.subr.bf16.mxu0 0
    %1062 = vmatpush1.bf16.msra.mxu0 0
    %1063 = vmatprep.subr.bf16.mxu0 0
    %1064 = vmatpush1.bf16.msra.mxu0 0
    %1065 = vmatprep.subr.bf16.mxu0 0
    %1066 = vmatpush1.bf16.msra.mxu0 0
    %1067 = vmatprep.subr.bf16.mxu0 0
    %1068 = vmatpush1.bf16.msra.mxu0 0
    %1069 = vmatprep.subr.bf16.mxu0 0
    %1070 = vmatpush1.bf16.msra.mxu0 0
    %1071 = vmatprep.subr.bf16.mxu0 0
    %1072 = vmatpush1.bf16.msra.mxu0 0
    %1073 = vmatprep.subr.bf16.mxu0 0
    %1074 = vmatpush1.bf16.msra.mxu0 0
    %1075 = vmatprep.subr.bf16.mxu0 0
    %1076 = vmatpush1.bf16.msra.mxu0 0
    %1077 = vmatprep.subr.bf16.mxu0 0
    %1078 = vmatpush1.bf16.msra.mxu0 0
    %1079 = vmatprep.subr.bf16.mxu0 0
    %1080 = vmatpush1.bf16.msra.mxu0 0
    %1081 = vmatprep.subr.bf16.mxu0 0
    %1082 = vmatpush1.bf16.msra.mxu0 0
    %1083 = vmatprep.mubr.bf16.mxu0 0
    %1084 = vmatmul.mubr.bf16.gmra.mrb[0].mxu0 %v1049
    %v1085 = vpop.f32.mrb[0].mxu0
    %v1086 = vadd.f32 0.0, %v1085
    %v1087 = vpop.f32.mrb[0].mxu0
    %v1088 = vpop.f32.mrb[0].mxu0
    %v1089 = vpop.f32.mrb[0].mxu0
    %1090 = vdwg.mxu0
    %v1092 = vrot.slane %v1086, 5
    %v1093 = vrot.slane %v1086, 6
    %v1094 = vrot.slane %v1086, 7
    %v1095 = vrot.slane %v1086, 1
    %v1096 = vrot.slane %v1086, 2
    %v1097 = vrot.slane %v1086, 3
    %v1098 = vrot.slane %v1086, 4
    %v1107 = vadd.f32 %v146, %v1092
    %v1108 = vadd.f32 %v149, %v1093
    %v1109 = vadd.f32 %v154, %v1094
    %v1110 = vadd.f32 %v157, %v1086
    %v1111 = vadd.f32 %v162, %v1095
    %v1112 = vadd.f32 %v165, %v1096
    %v1113 = vadd.f32 %v170, %v1097
    %v1114 = vadd.f32 %v173, %v1098
    %v1115 = vtanh.pop %v1107
    %v1116 = vtanh.pop %v1108
    %v1117 = vtanh.pop %v1109
    %v1118 = vtanh.pop %v1110
    %v1119 = vtanh.pop %v1111
    %v1120 = vtanh.pop %v1112
    %v1121 = vtanh.pop %v1113
    %v1122 = vtanh.pop %v1114
    %v1123 = vmul.f32 %v1115, 0.5
    %v1124 = vmul.f32 %v1116, 0.5
    %v1125 = vmul.f32 %v1117, 0.5
    %v1126 = vmul.f32 %v1118, 0.5
    %v1127 = vmul.f32 %v1119, 0.5
    %v1128 = vmul.f32 %v1120, 0.5
    %v1129 = vmul.f32 %v1121, 0.5
    %v1130 = vmul.f32 %v1122, 0.5
    %v1131 = vadd.f32 %v1123, 0.5
    %v1132 = vadd.f32 %v1124, 0.5
    %v1133 = vadd.f32 %v1125, 0.5
    %v1134 = vadd.f32 %v1126, 0.5
    %v1135 = vadd.f32 %v1127, 0.5
    %v1136 = vadd.f32 %v1128, 0.5
    %v1137 = vadd.f32 %v1129, 0.5
    %v1138 = vadd.f32 %v1130, 0.5
    %v1147 = vrot.slane %v951, 7
    %v1148 = vrot.slane %v952, 7
    %v1149 = vrot.slane %v953, 7
    %v1150 = vrot.slane %v954, 7
    %v1151 = vrot.slane %v955, 7
    %v1152 = vrot.slane %v956, 7
    %v1153 = vrot.slane %v957, 7
    %v1154 = vrot.slane %v958, 7
    %v1163 = vmul.f32 %v1131, %v1147
    %v1164 = vmul.f32 %v1132, %v1148
    %v1165 = vmul.f32 %v1133, %v1149
    %v1166 = vmul.f32 %v1134, %v1150
    %v1167 = vmul.f32 %v1135, %v1151
    %v1168 = vmul.f32 %v1136, %v1152
    %v1169 = vmul.f32 %v1137, %v1153
    %v1170 = vmul.f32 %v1138, %v1154
    %1179 = vrot.lane.b32.xlu0 %v1115, 64
    %v1180 = vpop.permute.xlu0 %1179
    %1181 = vrot.lane.b32.xlu0 %v1116, 64
    %v1182 = vpop.permute.xlu0 %1181
    %1183 = vrot.lane.b32.xlu0 %v1117, 64
    %v1184 = vpop.permute.xlu0 %1183
    %1185 = vrot.lane.b32.xlu0 %v1118, 64
    %v1186 = vpop.permute.xlu0 %1185
    %1187 = vrot.lane.b32.xlu0 %v1119, 64
    %v1188 = vpop.permute.xlu0 %1187
    %1189 = vrot.lane.b32.xlu0 %v1120, 64
    %v1190 = vpop.permute.xlu0 %1189
    %1191 = vrot.lane.b32.xlu0 %v1121, 64
    %v1192 = vpop.permute.xlu0 %1191
    %1193 = vrot.lane.b32.xlu0 %v1122, 64
    %v1194 = vpop.permute.xlu0 %1193
    %v1203 = vmul.f32 %v1131, %v1180
    %v1204 = vmul.f32 %v1132, %v1182
    %v1205 = vmul.f32 %v1133, %v1184
    %v1206 = vmul.f32 %v1134, %v1186
    %v1207 = vmul.f32 %v1135, %v1188
    %v1208 = vmul.f32 %v1136, %v1190
    %v1209 = vmul.f32 %v1137, %v1192
    %v1210 = vmul.f32 %v1138, %v1194
    %1219 = vrot.lane.b32.xlu0 %v1203, 32
    %v1220 = vpop.permute.xlu0 %1219
    %1221 = vrot.lane.b32.xlu0 %v1204, 32
    %v1222 = vpop.permute.xlu0 %1221
    %1223 = vrot.lane.b32.xlu0 %v1205, 32
    %v1224 = vpop.permute.xlu0 %1223
    %1225 = vrot.lane.b32.xlu0 %v1206, 32
    %v1226 = vpop.permute.xlu0 %1225
    %1227 = vrot.lane.b32.xlu0 %v1207, 32
    %v1228 = vpop.permute.xlu0 %1227
    %1229 = vrot.lane.b32.xlu0 %v1208, 32
    %v1230 = vpop.permute.xlu0 %1229
    %1231 = vrot.lane.b32.xlu0 %v1209, 32
    %v1232 = vpop.permute.xlu0 %1231
    %1233 = vrot.lane.b32.xlu0 %v1210, 32
    %v1234 = vpop.permute.xlu0 %1233
    %v1243 = vadd.f32 %v1163, %v1220
    %v1244 = vadd.f32 %v1164, %v1222
    %v1245 = vadd.f32 %v1165, %v1224
    %v1246 = vadd.f32 %v1166, %v1226
    %v1247 = vadd.f32 %v1167, %v1228
    %v1248 = vadd.f32 %v1168, %v1230
    %v1249 = vadd.f32 %v1169, %v1232
    %v1250 = vadd.f32 %v1170, %v1234
    %v1251 = vtanh.pop %v1243
    %v1252 = vtanh.pop %v1244
    %v1253 = vtanh.pop %v1245
    %v1254 = vtanh.pop %v1246
    %v1255 = vtanh.pop %v1247
    %v1256 = vtanh.pop %v1248
    %v1257 = vtanh.pop %v1249
    %v1258 = vtanh.pop %v1250
    %1267 = vrot.lane.b32.xlu0 %v1251, 64
    %v1268 = vpop.permute.xlu0 %1267
    %1269 = vrot.lane.b32.xlu0 %v1252, 64
    %v1270 = vpop.permute.xlu0 %1269
    %1271 = vrot.lane.b32.xlu0 %v1253, 64
    %v1272 = vpop.permute.xlu0 %1271
    %1273 = vrot.lane.b32.xlu0 %v1254, 64
    %v1274 = vpop.permute.xlu0 %1273
    %1275 = vrot.lane.b32.xlu0 %v1255, 64
    %v1276 = vpop.permute.xlu0 %1275
    %1277 = vrot.lane.b32.xlu0 %v1256, 64
    %v1278 = vpop.permute.xlu0 %1277
    %1279 = vrot.lane.b32.xlu0 %v1257, 64
    %v1280 = vpop.permute.xlu0 %1279
    %1281 = vrot.lane.b32.xlu0 %v1258, 64
    %v1282 = vpop.permute.xlu0 %1281
    %v1291 = vmul.f32 %v1131, %v1268
    %v1292 = vmul.f32 %v1132, %v1270
    %v1293 = vmul.f32 %v1133, %v1272
    %v1294 = vmul.f32 %v1134, %v1274
    %v1295 = vmul.f32 %v1135, %v1276
    %v1296 = vmul.f32 %v1136, %v1278
    %v1297 = vmul.f32 %v1137, %v1280
    %v1298 = vmul.f32 %v1138, %v1282
    %v1299 = vpack.c.bf16 %v1291, %v1291
    %v1300 = vpack.c.bf16 %v1292, %v1292
    %v1301 = vpack.c.bf16 %v1293, %v1293
    %v1302 = vpack.c.bf16 %v1294, %v1294
    %v1303 = vpack.c.bf16 %v1295, %v1295
    %v1304 = vpack.c.bf16 %v1296, %v1296
    %v1305 = vpack.c.bf16 %v1297, %v1297
    %v1306 = vpack.c.bf16 %v1298, %v1298
    %v1315 = vunpack.c.l.b16 %v1299
    %v1316 = vunpack.c.l.b16 %v1300
    %v1317 = vunpack.c.l.b16 %v1301
    %v1318 = vunpack.c.l.b16 %v1302
    %v1319 = vunpack.c.l.b16 %v1303
    %v1320 = vunpack.c.l.b16 %v1304
    %v1321 = vunpack.c.l.b16 %v1305
    %v1322 = vunpack.c.l.b16 %v1306
    %v1323 = vrot.slane %v1315, 3
    %v1324 = vrot.slane %v1316, 2
    %v1325 = vsel %vm441, %v1324, %v1323
    %v1326 = vrot.slane %v1317, 1
    %v1327 = vsel %vm444, %v1326, %v1325
    %v1328 = vsel %vm447, %v1318, %v1327
    %v1329 = vrot.slane %v1319, 7
    %v1330 = vsel %vm450, %v1329, %v1328
    %v1331 = vrot.slane %v1320, 6
    %v1332 = vsel %vm453, %v1331, %v1330
    %v1333 = vrot.slane %v1321, 5
    %v1334 = vsel %vm456, %v1333, %v1332
    %v1335 = vrot.slane %v1322, 4
    %v1336 = vsel %vm459, %v1335, %v1334
    %v1337 = vpack.c.b16 %v1336, %v1336
    %1338 = vrot.lane.b32.xlu0 %v1337, 32
    %v1339 = vpop.permute.xlu0 %1338
    %v1341 = vsel %vm188, %v1339, 0
    %1343 = vmatprep.subr.bf16.mxu0 0
    %1344 = vmatpush1.bf16.msra.mxu0 %v184
    %1345 = vmatprep.subr.bf16.mxu0 0
    %1346 = vmatpush1.bf16.msra.mxu0 %v185
    %1347 = vmatprep.subr.bf16.mxu0 0
    %1348 = vmatpush1.bf16.msra.mxu0 0
    %1349 = vmatprep.subr.bf16.mxu0 0
    %1350 = vmatpush1.bf16.msra.mxu0 0
    %1351 = vmatprep.subr.bf16.mxu0 0
    %1352 = vmatpush1.bf16.msra.mxu0 0
    %1353 = vmatprep.subr.bf16.mxu0 0
    %1354 = vmatpush1.bf16.msra.mxu0 0
    %1355 = vmatprep.subr.bf16.mxu0 0
    %1356 = vmatpush1.bf16.msra.mxu0 0
    %1357 = vmatprep.subr.bf16.mxu0 0
    %1358 = vmatpush1.bf16.msra.mxu0 0
    %1359 = vmatprep.subr.bf16.mxu0 0
    %1360 = vmatpush1.bf16.msra.mxu0 0
    %1361 = vmatprep.subr.bf16.mxu0 0
    %1362 = vmatpush1.bf16.msra.mxu0 0
    %1363 = vmatprep.subr.bf16.mxu0 0
    %1364 = vmatpush1.bf16.msra.mxu0 0
    %1365 = vmatprep.subr.bf16.mxu0 0
    %1366 = vmatpush1.bf16.msra.mxu0 0
    %1367 = vmatprep.subr.bf16.mxu0 0
    %1368 = vmatpush1.bf16.msra.mxu0 0
    %1369 = vmatprep.subr.bf16.mxu0 0
    %1370 = vmatpush1.bf16.msra.mxu0 0
    %1371 = vmatprep.subr.bf16.mxu0 0
    %1372 = vmatpush1.bf16.msra.mxu0 0
    %1373 = vmatprep.subr.bf16.mxu0 0
    %1374 = vmatpush1.bf16.msra.mxu0 0
    %1375 = vmatprep.mubr.bf16.mxu0 0
    %1376 = vmatmul.mubr.bf16.gmra.mrb[0].mxu0 %v1341
    %v1377 = vpop.f32.mrb[0].mxu0
    %v1378 = vadd.f32 0.0, %v1377
    %v1379 = vpop.f32.mrb[0].mxu0
    %v1380 = vpop.f32.mrb[0].mxu0
    %v1381 = vpop.f32.mrb[0].mxu0
    %1382 = vdwg.mxu0
    %v1384 = vrot.slane %v1378, 4
    %v1385 = vrot.slane %v1378, 5
    %v1386 = vrot.slane %v1378, 6
    %v1387 = vrot.slane %v1378, 7
    %v1388 = vrot.slane %v1378, 1
    %v1389 = vrot.slane %v1378, 2
    %v1390 = vrot.slane %v1378, 3
    %v1399 = vadd.f32 %v146, %v1384
    %v1400 = vadd.f32 %v149, %v1385
    %v1401 = vadd.f32 %v154, %v1386
    %v1402 = vadd.f32 %v157, %v1387
    %v1403 = vadd.f32 %v162, %v1378
    %v1404 = vadd.f32 %v165, %v1388
    %v1405 = vadd.f32 %v170, %v1389
    %v1406 = vadd.f32 %v173, %v1390
    %v1407 = vtanh.pop %v1399
    %v1408 = vtanh.pop %v1400
    %v1409 = vtanh.pop %v1401
    %v1410 = vtanh.pop %v1402
    %v1411 = vtanh.pop %v1403
    %v1412 = vtanh.pop %v1404
    %v1413 = vtanh.pop %v1405
    %v1414 = vtanh.pop %v1406
    %v1415 = vmul.f32 %v1407, 0.5
    %v1416 = vmul.f32 %v1408, 0.5
    %v1417 = vmul.f32 %v1409, 0.5
    %v1418 = vmul.f32 %v1410, 0.5
    %v1419 = vmul.f32 %v1411, 0.5
    %v1420 = vmul.f32 %v1412, 0.5
    %v1421 = vmul.f32 %v1413, 0.5
    %v1422 = vmul.f32 %v1414, 0.5
    %v1423 = vadd.f32 %v1415, 0.5
    %v1424 = vadd.f32 %v1416, 0.5
    %v1425 = vadd.f32 %v1417, 0.5
    %v1426 = vadd.f32 %v1418, 0.5
    %v1427 = vadd.f32 %v1419, 0.5
    %v1428 = vadd.f32 %v1420, 0.5
    %v1429 = vadd.f32 %v1421, 0.5
    %v1430 = vadd.f32 %v1422, 0.5
    %v1439 = vrot.slane %v1243, 7
    %v1440 = vrot.slane %v1244, 7
    %v1441 = vrot.slane %v1245, 7
    %v1442 = vrot.slane %v1246, 7
    %v1443 = vrot.slane %v1247, 7
    %v1444 = vrot.slane %v1248, 7
    %v1445 = vrot.slane %v1249, 7
    %v1446 = vrot.slane %v1250, 7
    %v1455 = vmul.f32 %v1423, %v1439
    %v1456 = vmul.f32 %v1424, %v1440
    %v1457 = vmul.f32 %v1425, %v1441
    %v1458 = vmul.f32 %v1426, %v1442
    %v1459 = vmul.f32 %v1427, %v1443
    %v1460 = vmul.f32 %v1428, %v1444
    %v1461 = vmul.f32 %v1429, %v1445
    %v1462 = vmul.f32 %v1430, %v1446
    %1471 = vrot.lane.b32.xlu0 %v1407, 64
    %v1472 = vpop.permute.xlu0 %1471
    %1473 = vrot.lane.b32.xlu0 %v1408, 64
    %v1474 = vpop.permute.xlu0 %1473
    %1475 = vrot.lane.b32.xlu0 %v1409, 64
    %v1476 = vpop.permute.xlu0 %1475
    %1477 = vrot.lane.b32.xlu0 %v1410, 64
    %v1478 = vpop.permute.xlu0 %1477
    %1479 = vrot.lane.b32.xlu0 %v1411, 64
    %v1480 = vpop.permute.xlu0 %1479
    %1481 = vrot.lane.b32.xlu0 %v1412, 64
    %v1482 = vpop.permute.xlu0 %1481
    %1483 = vrot.lane.b32.xlu0 %v1413, 64
    %v1484 = vpop.permute.xlu0 %1483
    %1485 = vrot.lane.b32.xlu0 %v1414, 64
    %v1486 = vpop.permute.xlu0 %1485
    %v1495 = vmul.f32 %v1423, %v1472
    %v1496 = vmul.f32 %v1424, %v1474
    %v1497 = vmul.f32 %v1425, %v1476
    %v1498 = vmul.f32 %v1426, %v1478
    %v1499 = vmul.f32 %v1427, %v1480
    %v1500 = vmul.f32 %v1428, %v1482
    %v1501 = vmul.f32 %v1429, %v1484
    %v1502 = vmul.f32 %v1430, %v1486
    %1511 = vrot.lane.b32.xlu0 %v1495, 32
    %v1512 = vpop.permute.xlu0 %1511
    %1513 = vrot.lane.b32.xlu0 %v1496, 32
    %v1514 = vpop.permute.xlu0 %1513
    %1515 = vrot.lane.b32.xlu0 %v1497, 32
    %v1516 = vpop.permute.xlu0 %1515
    %1517 = vrot.lane.b32.xlu0 %v1498, 32
    %v1518 = vpop.permute.xlu0 %1517
    %1519 = vrot.lane.b32.xlu0 %v1499, 32
    %v1520 = vpop.permute.xlu0 %1519
    %1521 = vrot.lane.b32.xlu0 %v1500, 32
    %v1522 = vpop.permute.xlu0 %1521
    %1523 = vrot.lane.b32.xlu0 %v1501, 32
    %v1524 = vpop.permute.xlu0 %1523
    %1525 = vrot.lane.b32.xlu0 %v1502, 32
    %v1526 = vpop.permute.xlu0 %1525
    %v1535 = vadd.f32 %v1455, %v1512
    %v1536 = vadd.f32 %v1456, %v1514
    %v1537 = vadd.f32 %v1457, %v1516
    %v1538 = vadd.f32 %v1458, %v1518
    %v1539 = vadd.f32 %v1459, %v1520
    %v1540 = vadd.f32 %v1460, %v1522
    %v1541 = vadd.f32 %v1461, %v1524
    %v1542 = vadd.f32 %v1462, %v1526
    %v1543 = vtanh.pop %v1535
    %v1544 = vtanh.pop %v1536
    %v1545 = vtanh.pop %v1537
    %v1546 = vtanh.pop %v1538
    %v1547 = vtanh.pop %v1539
    %v1548 = vtanh.pop %v1540
    %v1549 = vtanh.pop %v1541
    %v1550 = vtanh.pop %v1542
    %1559 = vrot.lane.b32.xlu0 %v1543, 64
    %v1560 = vpop.permute.xlu0 %1559
    %1561 = vrot.lane.b32.xlu0 %v1544, 64
    %v1562 = vpop.permute.xlu0 %1561
    %1563 = vrot.lane.b32.xlu0 %v1545, 64
    %v1564 = vpop.permute.xlu0 %1563
    %1565 = vrot.lane.b32.xlu0 %v1546, 64
    %v1566 = vpop.permute.xlu0 %1565
    %1567 = vrot.lane.b32.xlu0 %v1547, 64
    %v1568 = vpop.permute.xlu0 %1567
    %1569 = vrot.lane.b32.xlu0 %v1548, 64
    %v1570 = vpop.permute.xlu0 %1569
    %1571 = vrot.lane.b32.xlu0 %v1549, 64
    %v1572 = vpop.permute.xlu0 %1571
    %1573 = vrot.lane.b32.xlu0 %v1550, 64
    %v1574 = vpop.permute.xlu0 %1573
    %v1583 = vmul.f32 %v1423, %v1560
    %v1584 = vmul.f32 %v1424, %v1562
    %v1585 = vmul.f32 %v1425, %v1564
    %v1586 = vmul.f32 %v1426, %v1566
    %v1587 = vmul.f32 %v1427, %v1568
    %v1588 = vmul.f32 %v1428, %v1570
    %v1589 = vmul.f32 %v1429, %v1572
    %v1590 = vmul.f32 %v1430, %v1574
    %v1591 = vpack.c.bf16 %v1583, %v1583
    %v1592 = vpack.c.bf16 %v1584, %v1584
    %v1593 = vpack.c.bf16 %v1585, %v1585
    %v1594 = vpack.c.bf16 %v1586, %v1586
    %v1595 = vpack.c.bf16 %v1587, %v1587
    %v1596 = vpack.c.bf16 %v1588, %v1588
    %v1597 = vpack.c.bf16 %v1589, %v1589
    %v1598 = vpack.c.bf16 %v1590, %v1590
    %v1607 = vunpack.c.l.b16 %v1591
    %v1608 = vunpack.c.l.b16 %v1592
    %v1609 = vunpack.c.l.b16 %v1593
    %v1610 = vunpack.c.l.b16 %v1594
    %v1611 = vunpack.c.l.b16 %v1595
    %v1612 = vunpack.c.l.b16 %v1596
    %v1613 = vunpack.c.l.b16 %v1597
    %v1614 = vunpack.c.l.b16 %v1598
    %v1615 = vrot.slane %v1607, 4
    %v1616 = vrot.slane %v1608, 3
    %v1617 = vsel %vm441, %v1616, %v1615
    %v1618 = vrot.slane %v1609, 2
    %v1619 = vsel %vm444, %v1618, %v1617
    %v1620 = vrot.slane %v1610, 1
    %v1621 = vsel %vm447, %v1620, %v1619
    %v1622 = vsel %vm450, %v1611, %v1621
    %v1623 = vrot.slane %v1612, 7
    %v1624 = vsel %vm453, %v1623, %v1622
    %v1625 = vrot.slane %v1613, 6
    %v1626 = vsel %vm456, %v1625, %v1624
    %v1627 = vrot.slane %v1614, 5
    %v1628 = vsel %vm459, %v1627, %v1626
    %v1629 = vpack.c.b16 %v1628, %v1628
    %1630 = vrot.lane.b32.xlu0 %v1629, 32
    %v1631 = vpop.permute.xlu0 %1630
    %v1633 = vsel %vm188, %v1631, 0
    %1635 = vmatprep.subr.bf16.mxu0 0
    %1636 = vmatpush1.bf16.msra.mxu0 %v184
    %1637 = vmatprep.subr.bf16.mxu0 0
    %1638 = vmatpush1.bf16.msra.mxu0 %v185
    %1639 = vmatprep.subr.bf16.mxu0 0
    %1640 = vmatpush1.bf16.msra.mxu0 0
    %1641 = vmatprep.subr.bf16.mxu0 0
    %1642 = vmatpush1.bf16.msra.mxu0 0
    %1643 = vmatprep.subr.bf16.mxu0 0
    %1644 = vmatpush1.bf16.msra.mxu0 0
    %1645 = vmatprep.subr.bf16.mxu0 0
    %1646 = vmatpush1.bf16.msra.mxu0 0
    %1647 = vmatprep.subr.bf16.mxu0 0
    %1648 = vmatpush1.bf16.msra.mxu0 0
    %1649 = vmatprep.subr.bf16.mxu0 0
    %1650 = vmatpush1.bf16.msra.mxu0 0
    %1651 = vmatprep.subr.bf16.mxu0 0
    %1652 = vmatpush1.bf16.msra.mxu0 0
    %1653 = vmatprep.subr.bf16.mxu0 0
    %1654 = vmatpush1.bf16.msra.mxu0 0
    %1655 = vmatprep.subr.bf16.mxu0 0
    %1656 = vmatpush1.bf16.msra.mxu0 0
    %1657 = vmatprep.subr.bf16.mxu0 0
    %1658 = vmatpush1.bf16.msra.mxu0 0
    %1659 = vmatprep.subr.bf16.mxu0 0
    %1660 = vmatpush1.bf16.msra.mxu0 0
    %1661 = vmatprep.subr.bf16.mxu0 0
    %1662 = vmatpush1.bf16.msra.mxu0 0
    %1663 = vmatprep.subr.bf16.mxu0 0
    %1664 = vmatpush1.bf16.msra.mxu0 0
    %1665 = vmatprep.subr.bf16.mxu0 0
    %1666 = vmatpush1.bf16.msra.mxu0 0
    %1667 = vmatprep.mubr.bf16.mxu0 0
    %1668 = vmatmul.mubr.bf16.gmra.mrb[0].mxu0 %v1633
    %v1669 = vpop.f32.mrb[0].mxu0
    %v1670 = vadd.f32 0.0, %v1669
    %v1671 = vpop.f32.mrb[0].mxu0
    %v1672 = vpop.f32.mrb[0].mxu0
    %v1673 = vpop.f32.mrb[0].mxu0
    %1674 = vdwg.mxu0
    %v1676 = vrot.slane %v1670, 3
    %v1677 = vrot.slane %v1670, 4
    %v1678 = vrot.slane %v1670, 5
    %v1679 = vrot.slane %v1670, 6
    %v1680 = vrot.slane %v1670, 7
    %v1681 = vrot.slane %v1670, 1
    %v1682 = vrot.slane %v1670, 2
    %v1691 = vadd.f32 %v146, %v1676
    %v1692 = vadd.f32 %v149, %v1677
    %v1693 = vadd.f32 %v154, %v1678
    %v1694 = vadd.f32 %v157, %v1679
    %v1695 = vadd.f32 %v162, %v1680
    %v1696 = vadd.f32 %v165, %v1670
    %v1697 = vadd.f32 %v170, %v1681
    %v1698 = vadd.f32 %v173, %v1682
    %v1699 = vtanh.pop %v1691
    %v1700 = vtanh.pop %v1692
    %v1701 = vtanh.pop %v1693
    %v1702 = vtanh.pop %v1694
    %v1703 = vtanh.pop %v1695
    %v1704 = vtanh.pop %v1696
    %v1705 = vtanh.pop %v1697
    %v1706 = vtanh.pop %v1698
    %v1707 = vmul.f32 %v1699, 0.5
    %v1708 = vmul.f32 %v1700, 0.5
    %v1709 = vmul.f32 %v1701, 0.5
    %v1710 = vmul.f32 %v1702, 0.5
    %v1711 = vmul.f32 %v1703, 0.5
    %v1712 = vmul.f32 %v1704, 0.5
    %v1713 = vmul.f32 %v1705, 0.5
    %v1714 = vmul.f32 %v1706, 0.5
    %v1715 = vadd.f32 %v1707, 0.5
    %v1716 = vadd.f32 %v1708, 0.5
    %v1717 = vadd.f32 %v1709, 0.5
    %v1718 = vadd.f32 %v1710, 0.5
    %v1719 = vadd.f32 %v1711, 0.5
    %v1720 = vadd.f32 %v1712, 0.5
    %v1721 = vadd.f32 %v1713, 0.5
    %v1722 = vadd.f32 %v1714, 0.5
    %v1731 = vrot.slane %v1535, 7
    %v1732 = vrot.slane %v1536, 7
    %v1733 = vrot.slane %v1537, 7
    %v1734 = vrot.slane %v1538, 7
    %v1735 = vrot.slane %v1539, 7
    %v1736 = vrot.slane %v1540, 7
    %v1737 = vrot.slane %v1541, 7
    %v1738 = vrot.slane %v1542, 7
    %v1747 = vmul.f32 %v1715, %v1731
    %v1748 = vmul.f32 %v1716, %v1732
    %v1749 = vmul.f32 %v1717, %v1733
    %v1750 = vmul.f32 %v1718, %v1734
    %v1751 = vmul.f32 %v1719, %v1735
    %v1752 = vmul.f32 %v1720, %v1736
    %v1753 = vmul.f32 %v1721, %v1737
    %v1754 = vmul.f32 %v1722, %v1738
    %1763 = vrot.lane.b32.xlu0 %v1699, 64
    %v1764 = vpop.permute.xlu0 %1763
    %1765 = vrot.lane.b32.xlu0 %v1700, 64
    %v1766 = vpop.permute.xlu0 %1765
    %1767 = vrot.lane.b32.xlu0 %v1701, 64
    %v1768 = vpop.permute.xlu0 %1767
    %1769 = vrot.lane.b32.xlu0 %v1702, 64
    %v1770 = vpop.permute.xlu0 %1769
    %1771 = vrot.lane.b32.xlu0 %v1703, 64
    %v1772 = vpop.permute.xlu0 %1771
    %1773 = vrot.lane.b32.xlu0 %v1704, 64
    %v1774 = vpop.permute.xlu0 %1773
    %1775 = vrot.lane.b32.xlu0 %v1705, 64
    %v1776 = vpop.permute.xlu0 %1775
    %1777 = vrot.lane.b32.xlu0 %v1706, 64
    %v1778 = vpop.permute.xlu0 %1777
    %v1787 = vmul.f32 %v1715, %v1764
    %v1788 = vmul.f32 %v1716, %v1766
    %v1789 = vmul.f32 %v1717, %v1768
    %v1790 = vmul.f32 %v1718, %v1770
    %v1791 = vmul.f32 %v1719, %v1772
    %v1792 = vmul.f32 %v1720, %v1774
    %v1793 = vmul.f32 %v1721, %v1776
    %v1794 = vmul.f32 %v1722, %v1778
    %1803 = vrot.lane.b32.xlu0 %v1787, 32
    %v1804 = vpop.permute.xlu0 %1803
    %1805 = vrot.lane.b32.xlu0 %v1788, 32
    %v1806 = vpop.permute.xlu0 %1805
    %1807 = vrot.lane.b32.xlu0 %v1789, 32
    %v1808 = vpop.permute.xlu0 %1807
    %1809 = vrot.lane.b32.xlu0 %v1790, 32
    %v1810 = vpop.permute.xlu0 %1809
    %1811 = vrot.lane.b32.xlu0 %v1791, 32
    %v1812 = vpop.permute.xlu0 %1811
    %1813 = vrot.lane.b32.xlu0 %v1792, 32
    %v1814 = vpop.permute.xlu0 %1813
    %1815 = vrot.lane.b32.xlu0 %v1793, 32
    %v1816 = vpop.permute.xlu0 %1815
    %1817 = vrot.lane.b32.xlu0 %v1794, 32
    %v1818 = vpop.permute.xlu0 %1817
    %v1827 = vadd.f32 %v1747, %v1804
    %v1828 = vadd.f32 %v1748, %v1806
    %v1829 = vadd.f32 %v1749, %v1808
    %v1830 = vadd.f32 %v1750, %v1810
    %v1831 = vadd.f32 %v1751, %v1812
    %v1832 = vadd.f32 %v1752, %v1814
    %v1833 = vadd.f32 %v1753, %v1816
    %v1834 = vadd.f32 %v1754, %v1818
    %v1835 = vtanh.pop %v1827
    %v1836 = vtanh.pop %v1828
    %v1837 = vtanh.pop %v1829
    %v1838 = vtanh.pop %v1830
    %v1839 = vtanh.pop %v1831
    %v1840 = vtanh.pop %v1832
    %v1841 = vtanh.pop %v1833
    %v1842 = vtanh.pop %v1834
    %1851 = vrot.lane.b32.xlu0 %v1835, 64
    %v1852 = vpop.permute.xlu0 %1851
    %1853 = vrot.lane.b32.xlu0 %v1836, 64
    %v1854 = vpop.permute.xlu0 %1853
    %1855 = vrot.lane.b32.xlu0 %v1837, 64
    %v1856 = vpop.permute.xlu0 %1855
    %1857 = vrot.lane.b32.xlu0 %v1838, 64
    %v1858 = vpop.permute.xlu0 %1857
    %1859 = vrot.lane.b32.xlu0 %v1839, 64
    %v1860 = vpop.permute.xlu0 %1859
    %1861 = vrot.lane.b32.xlu0 %v1840, 64
    %v1862 = vpop.permute.xlu0 %1861
    %1863 = vrot.lane.b32.xlu0 %v1841, 64
    %v1864 = vpop.permute.xlu0 %1863
    %1865 = vrot.lane.b32.xlu0 %v1842, 64
    %v1866 = vpop.permute.xlu0 %1865
    %v1875 = vmul.f32 %v1715, %v1852
    %v1876 = vmul.f32 %v1716, %v1854
    %v1877 = vmul.f32 %v1717, %v1856
    %v1878 = vmul.f32 %v1718, %v1858
    %v1879 = vmul.f32 %v1719, %v1860
    %v1880 = vmul.f32 %v1720, %v1862
    %v1881 = vmul.f32 %v1721, %v1864
    %v1882 = vmul.f32 %v1722, %v1866
    %v1883 = vpack.c.bf16 %v1875, %v1875
    %v1884 = vpack.c.bf16 %v1876, %v1876
    %v1885 = vpack.c.bf16 %v1877, %v1877
    %v1886 = vpack.c.bf16 %v1878, %v1878
    %v1887 = vpack.c.bf16 %v1879, %v1879
    %v1888 = vpack.c.bf16 %v1880, %v1880
    %v1889 = vpack.c.bf16 %v1881, %v1881
    %v1890 = vpack.c.bf16 %v1882, %v1882
    %v1899 = vunpack.c.l.b16 %v1883
    %v1900 = vunpack.c.l.b16 %v1884
    %v1901 = vunpack.c.l.b16 %v1885
    %v1902 = vunpack.c.l.b16 %v1886
    %v1903 = vunpack.c.l.b16 %v1887
    %v1904 = vunpack.c.l.b16 %v1888
    %v1905 = vunpack.c.l.b16 %v1889
    %v1906 = vunpack.c.l.b16 %v1890
    %v1907 = vrot.slane %v1899, 5
    %v1908 = vrot.slane %v1900, 4
    %v1909 = vsel %vm441, %v1908, %v1907
    %v1910 = vrot.slane %v1901, 3
    %v1911 = vsel %vm444, %v1910, %v1909
    %v1912 = vrot.slane %v1902, 2
    %v1913 = vsel %vm447, %v1912, %v1911
    %v1914 = vrot.slane %v1903, 1
    %v1915 = vsel %vm450, %v1914, %v1913
    %v1916 = vsel %vm453, %v1904, %v1915
    %v1917 = vrot.slane %v1905, 7
    %v1918 = vsel %vm456, %v1917, %v1916
    %v1919 = vrot.slane %v1906, 6
    %v1920 = vsel %vm459, %v1919, %v1918
    %v1921 = vpack.c.b16 %v1920, %v1920
    %1922 = vrot.lane.b32.xlu0 %v1921, 32
    %v1923 = vpop.permute.xlu0 %1922
    %v1925 = vsel %vm188, %v1923, 0
    %1927 = vmatprep.subr.bf16.mxu0 0
    %1928 = vmatpush1.bf16.msra.mxu0 %v184
    %1929 = vmatprep.subr.bf16.mxu0 0
    %1930 = vmatpush1.bf16.msra.mxu0 %v185
    %1931 = vmatprep.subr.bf16.mxu0 0
    %1932 = vmatpush1.bf16.msra.mxu0 0
    %1933 = vmatprep.subr.bf16.mxu0 0
    %1934 = vmatpush1.bf16.msra.mxu0 0
    %1935 = vmatprep.subr.bf16.mxu0 0
    %1936 = vmatpush1.bf16.msra.mxu0 0
    %1937 = vmatprep.subr.bf16.mxu0 0
    %1938 = vmatpush1.bf16.msra.mxu0 0
    %1939 = vmatprep.subr.bf16.mxu0 0
    %1940 = vmatpush1.bf16.msra.mxu0 0
    %1941 = vmatprep.subr.bf16.mxu0 0
    %1942 = vmatpush1.bf16.msra.mxu0 0
    %1943 = vmatprep.subr.bf16.mxu0 0
    %1944 = vmatpush1.bf16.msra.mxu0 0
    %1945 = vmatprep.subr.bf16.mxu0 0
    %1946 = vmatpush1.bf16.msra.mxu0 0
    %1947 = vmatprep.subr.bf16.mxu0 0
    %1948 = vmatpush1.bf16.msra.mxu0 0
    %1949 = vmatprep.subr.bf16.mxu0 0
    %1950 = vmatpush1.bf16.msra.mxu0 0
    %1951 = vmatprep.subr.bf16.mxu0 0
    %1952 = vmatpush1.bf16.msra.mxu0 0
    %1953 = vmatprep.subr.bf16.mxu0 0
    %1954 = vmatpush1.bf16.msra.mxu0 0
    %1955 = vmatprep.subr.bf16.mxu0 0
    %1956 = vmatpush1.bf16.msra.mxu0 0
    %1957 = vmatprep.subr.bf16.mxu0 0
    %1958 = vmatpush1.bf16.msra.mxu0 0
    %1959 = vmatprep.mubr.bf16.mxu0 0
    %1960 = vmatmul.mubr.bf16.gmra.mrb[0].mxu0 %v1925
    %v1961 = vpop.f32.mrb[0].mxu0
    %v1962 = vadd.f32 0.0, %v1961
    %v1963 = vpop.f32.mrb[0].mxu0
    %v1964 = vpop.f32.mrb[0].mxu0
    %v1965 = vpop.f32.mrb[0].mxu0
    %1966 = vdwg.mxu0
    %v1968 = vrot.slane %v1962, 2
    %v1969 = vrot.slane %v1962, 3
    %v1970 = vrot.slane %v1962, 4
    %v1971 = vrot.slane %v1962, 5
    %v1972 = vrot.slane %v1962, 6
    %v1973 = vrot.slane %v1962, 7
    %v1974 = vrot.slane %v1962, 1
    %v1983 = vadd.f32 %v146, %v1968
    %v1984 = vadd.f32 %v149, %v1969
    %v1985 = vadd.f32 %v154, %v1970
    %v1986 = vadd.f32 %v157, %v1971
    %v1987 = vadd.f32 %v162, %v1972
    %v1988 = vadd.f32 %v165, %v1973
    %v1989 = vadd.f32 %v170, %v1962
    %v1990 = vadd.f32 %v173, %v1974
    %v1991 = vtanh.pop %v1983
    %v1992 = vtanh.pop %v1984
    %v1993 = vtanh.pop %v1985
    %v1994 = vtanh.pop %v1986
    %v1995 = vtanh.pop %v1987
    %v1996 = vtanh.pop %v1988
    %v1997 = vtanh.pop %v1989
    %v1998 = vtanh.pop %v1990
    %v1999 = vmul.f32 %v1991, 0.5
    %v2000 = vmul.f32 %v1992, 0.5
    %v2001 = vmul.f32 %v1993, 0.5
    %v2002 = vmul.f32 %v1994, 0.5
    %v2003 = vmul.f32 %v1995, 0.5
    %v2004 = vmul.f32 %v1996, 0.5
    %v2005 = vmul.f32 %v1997, 0.5
    %v2006 = vmul.f32 %v1998, 0.5
    %v2007 = vadd.f32 %v1999, 0.5
    %v2008 = vadd.f32 %v2000, 0.5
    %v2009 = vadd.f32 %v2001, 0.5
    %v2010 = vadd.f32 %v2002, 0.5
    %v2011 = vadd.f32 %v2003, 0.5
    %v2012 = vadd.f32 %v2004, 0.5
    %v2013 = vadd.f32 %v2005, 0.5
    %v2014 = vadd.f32 %v2006, 0.5
    %v2023 = vrot.slane %v1827, 7
    %v2024 = vrot.slane %v1828, 7
    %v2025 = vrot.slane %v1829, 7
    %v2026 = vrot.slane %v1830, 7
    %v2027 = vrot.slane %v1831, 7
    %v2028 = vrot.slane %v1832, 7
    %v2029 = vrot.slane %v1833, 7
    %v2030 = vrot.slane %v1834, 7
    %v2039 = vmul.f32 %v2007, %v2023
    %v2040 = vmul.f32 %v2008, %v2024
    %v2041 = vmul.f32 %v2009, %v2025
    %v2042 = vmul.f32 %v2010, %v2026
    %v2043 = vmul.f32 %v2011, %v2027
    %v2044 = vmul.f32 %v2012, %v2028
    %v2045 = vmul.f32 %v2013, %v2029
    %v2046 = vmul.f32 %v2014, %v2030
    %2055 = vrot.lane.b32.xlu0 %v1991, 64
    %v2056 = vpop.permute.xlu0 %2055
    %2057 = vrot.lane.b32.xlu0 %v1992, 64
    %v2058 = vpop.permute.xlu0 %2057
    %2059 = vrot.lane.b32.xlu0 %v1993, 64
    %v2060 = vpop.permute.xlu0 %2059
    %2061 = vrot.lane.b32.xlu0 %v1994, 64
    %v2062 = vpop.permute.xlu0 %2061
    %2063 = vrot.lane.b32.xlu0 %v1995, 64
    %v2064 = vpop.permute.xlu0 %2063
    %2065 = vrot.lane.b32.xlu0 %v1996, 64
    %v2066 = vpop.permute.xlu0 %2065
    %2067 = vrot.lane.b32.xlu0 %v1997, 64
    %v2068 = vpop.permute.xlu0 %2067
    %2069 = vrot.lane.b32.xlu0 %v1998, 64
    %v2070 = vpop.permute.xlu0 %2069
    %v2079 = vmul.f32 %v2007, %v2056
    %v2080 = vmul.f32 %v2008, %v2058
    %v2081 = vmul.f32 %v2009, %v2060
    %v2082 = vmul.f32 %v2010, %v2062
    %v2083 = vmul.f32 %v2011, %v2064
    %v2084 = vmul.f32 %v2012, %v2066
    %v2085 = vmul.f32 %v2013, %v2068
    %v2086 = vmul.f32 %v2014, %v2070
    %2095 = vrot.lane.b32.xlu0 %v2079, 32
    %v2096 = vpop.permute.xlu0 %2095
    %2097 = vrot.lane.b32.xlu0 %v2080, 32
    %v2098 = vpop.permute.xlu0 %2097
    %2099 = vrot.lane.b32.xlu0 %v2081, 32
    %v2100 = vpop.permute.xlu0 %2099
    %2101 = vrot.lane.b32.xlu0 %v2082, 32
    %v2102 = vpop.permute.xlu0 %2101
    %2103 = vrot.lane.b32.xlu0 %v2083, 32
    %v2104 = vpop.permute.xlu0 %2103
    %2105 = vrot.lane.b32.xlu0 %v2084, 32
    %v2106 = vpop.permute.xlu0 %2105
    %2107 = vrot.lane.b32.xlu0 %v2085, 32
    %v2108 = vpop.permute.xlu0 %2107
    %2109 = vrot.lane.b32.xlu0 %v2086, 32
    %v2110 = vpop.permute.xlu0 %2109
    %v2119 = vadd.f32 %v2039, %v2096
    %v2120 = vadd.f32 %v2040, %v2098
    %v2121 = vadd.f32 %v2041, %v2100
    %v2122 = vadd.f32 %v2042, %v2102
    %v2123 = vadd.f32 %v2043, %v2104
    %v2124 = vadd.f32 %v2044, %v2106
    %v2125 = vadd.f32 %v2045, %v2108
    %v2126 = vadd.f32 %v2046, %v2110
    %v2127 = vtanh.pop %v2119
    %v2128 = vtanh.pop %v2120
    %v2129 = vtanh.pop %v2121
    %v2130 = vtanh.pop %v2122
    %v2131 = vtanh.pop %v2123
    %v2132 = vtanh.pop %v2124
    %v2133 = vtanh.pop %v2125
    %v2134 = vtanh.pop %v2126
    %2143 = vrot.lane.b32.xlu0 %v2127, 64
    %v2144 = vpop.permute.xlu0 %2143
    %2145 = vrot.lane.b32.xlu0 %v2128, 64
    %v2146 = vpop.permute.xlu0 %2145
    %2147 = vrot.lane.b32.xlu0 %v2129, 64
    %v2148 = vpop.permute.xlu0 %2147
    %2149 = vrot.lane.b32.xlu0 %v2130, 64
    %v2150 = vpop.permute.xlu0 %2149
    %2151 = vrot.lane.b32.xlu0 %v2131, 64
    %v2152 = vpop.permute.xlu0 %2151
    %2153 = vrot.lane.b32.xlu0 %v2132, 64
    %v2154 = vpop.permute.xlu0 %2153
    %2155 = vrot.lane.b32.xlu0 %v2133, 64
    %v2156 = vpop.permute.xlu0 %2155
    %2157 = vrot.lane.b32.xlu0 %v2134, 64
    %v2158 = vpop.permute.xlu0 %2157
    %v2167 = vmul.f32 %v2007, %v2144
    %v2168 = vmul.f32 %v2008, %v2146
    %v2169 = vmul.f32 %v2009, %v2148
    %v2170 = vmul.f32 %v2010, %v2150
    %v2171 = vmul.f32 %v2011, %v2152
    %v2172 = vmul.f32 %v2012, %v2154
    %v2173 = vmul.f32 %v2013, %v2156
    %v2174 = vmul.f32 %v2014, %v2158
    %v2175 = vpack.c.bf16 %v2167, %v2167
    %v2176 = vpack.c.bf16 %v2168, %v2168
    %v2177 = vpack.c.bf16 %v2169, %v2169
    %v2178 = vpack.c.bf16 %v2170, %v2170
    %v2179 = vpack.c.bf16 %v2171, %v2171
    %v2180 = vpack.c.bf16 %v2172, %v2172
    %v2181 = vpack.c.bf16 %v2173, %v2173
    %v2182 = vpack.c.bf16 %v2174, %v2174
    %v2191 = vunpack.c.l.b16 %v2175
    %v2192 = vunpack.c.l.b16 %v2176
    %v2193 = vunpack.c.l.b16 %v2177
    %v2194 = vunpack.c.l.b16 %v2178
    %v2195 = vunpack.c.l.b16 %v2179
    %v2196 = vunpack.c.l.b16 %v2180
    %v2197 = vunpack.c.l.b16 %v2181
    %v2198 = vunpack.c.l.b16 %v2182
    %v2199 = vrot.slane %v2191, 6
    %v2200 = vrot.slane %v2192, 5
    %v2201 = vsel %vm441, %v2200, %v2199
    %v2202 = vrot.slane %v2193, 4
    %v2203 = vsel %vm444, %v2202, %v2201
    %v2204 = vrot.slane %v2194, 3
    %v2205 = vsel %vm447, %v2204, %v2203
    %v2206 = vrot.slane %v2195, 2
    %v2207 = vsel %vm450, %v2206, %v2205
    %v2208 = vrot.slane %v2196, 1
    %v2209 = vsel %vm453, %v2208, %v2207
    %v2210 = vsel %vm456, %v2197, %v2209
    %v2211 = vrot.slane %v2198, 7
    %v2212 = vsel %vm459, %v2211, %v2210
    %v2213 = vpack.c.b16 %v2212, %v2212
    %2214 = vrot.lane.b32.xlu0 %v2213, 32
    %v2215 = vpop.permute.xlu0 %2214
    %v2217 = vsel %vm188, %v2215, 0
    %2219 = vmatprep.subr.bf16.mxu0 0
    %2220 = vmatpush1.bf16.msra.mxu0 %v184
    %2221 = vmatprep.subr.bf16.mxu0 0
    %2222 = vmatpush1.bf16.msra.mxu0 %v185
    %2223 = vmatprep.subr.bf16.mxu0 0
    %2224 = vmatpush1.bf16.msra.mxu0 0
    %2225 = vmatprep.subr.bf16.mxu0 0
    %2226 = vmatpush1.bf16.msra.mxu0 0
    %2227 = vmatprep.subr.bf16.mxu0 0
    %2228 = vmatpush1.bf16.msra.mxu0 0
    %2229 = vmatprep.subr.bf16.mxu0 0
    %2230 = vmatpush1.bf16.msra.mxu0 0
    %2231 = vmatprep.subr.bf16.mxu0 0
    %2232 = vmatpush1.bf16.msra.mxu0 0
    %2233 = vmatprep.subr.bf16.mxu0 0
    %2234 = vmatpush1.bf16.msra.mxu0 0
    %2235 = vmatprep.subr.bf16.mxu0 0
    %2236 = vmatpush1.bf16.msra.mxu0 0
    %2237 = vmatprep.subr.bf16.mxu0 0
    %2238 = vmatpush1.bf16.msra.mxu0 0
    %2239 = vmatprep.subr.bf16.mxu0 0
    %2240 = vmatpush1.bf16.msra.mxu0 0
    %2241 = vmatprep.subr.bf16.mxu0 0
    %2242 = vmatpush1.bf16.msra.mxu0 0
    %2243 = vmatprep.subr.bf16.mxu0 0
    %2244 = vmatpush1.bf16.msra.mxu0 0
    %2245 = vmatprep.subr.bf16.mxu0 0
    %2246 = vmatpush1.bf16.msra.mxu0 0
    %2247 = vmatprep.subr.bf16.mxu0 0
    %2248 = vmatpush1.bf16.msra.mxu0 0
    %2249 = vmatprep.subr.bf16.mxu0 0
    %2250 = vmatpush1.bf16.msra.mxu0 0
    %2251 = vmatprep.mubr.bf16.mxu0 0
    %2252 = vmatmul.mubr.bf16.gmra.mrb[0].mxu0 %v2217
    %v2253 = vpop.f32.mrb[0].mxu0
    %v2254 = vadd.f32 0.0, %v2253
    %v2255 = vpop.f32.mrb[0].mxu0
    %v2256 = vpop.f32.mrb[0].mxu0
    %v2257 = vpop.f32.mrb[0].mxu0
    %2258 = vdwg.mxu0
    %v2260 = vrot.slane %v2254, 1
    %v2261 = vrot.slane %v2254, 2
    %v2262 = vrot.slane %v2254, 3
    %v2263 = vrot.slane %v2254, 4
    %v2264 = vrot.slane %v2254, 5
    %v2265 = vrot.slane %v2254, 6
    %v2266 = vrot.slane %v2254, 7
    %v2275 = vadd.f32 %v146, %v2260
    %v2276 = vadd.f32 %v149, %v2261
    %v2277 = vadd.f32 %v154, %v2262
    %v2278 = vadd.f32 %v157, %v2263
    %v2279 = vadd.f32 %v162, %v2264
    %v2280 = vadd.f32 %v165, %v2265
    %v2281 = vadd.f32 %v170, %v2266
    %v2282 = vadd.f32 %v173, %v2254
    %v2283 = vtanh.pop %v2275
    %v2284 = vtanh.pop %v2276
    %v2285 = vtanh.pop %v2277
    %v2286 = vtanh.pop %v2278
    %v2287 = vtanh.pop %v2279
    %v2288 = vtanh.pop %v2280
    %v2289 = vtanh.pop %v2281
    %v2290 = vtanh.pop %v2282
    %v2291 = vmul.f32 %v2283, 0.5
    %v2292 = vmul.f32 %v2284, 0.5
    %v2293 = vmul.f32 %v2285, 0.5
    %v2294 = vmul.f32 %v2286, 0.5
    %v2295 = vmul.f32 %v2287, 0.5
    %v2296 = vmul.f32 %v2288, 0.5
    %v2297 = vmul.f32 %v2289, 0.5
    %v2298 = vmul.f32 %v2290, 0.5
    %v2299 = vadd.f32 %v2291, 0.5
    %v2300 = vadd.f32 %v2292, 0.5
    %v2301 = vadd.f32 %v2293, 0.5
    %v2302 = vadd.f32 %v2294, 0.5
    %v2303 = vadd.f32 %v2295, 0.5
    %v2304 = vadd.f32 %v2296, 0.5
    %v2305 = vadd.f32 %v2297, 0.5
    %v2306 = vadd.f32 %v2298, 0.5
    %v2315 = vrot.slane %v2119, 7
    %v2316 = vrot.slane %v2120, 7
    %v2317 = vrot.slane %v2121, 7
    %v2318 = vrot.slane %v2122, 7
    %v2319 = vrot.slane %v2123, 7
    %v2320 = vrot.slane %v2124, 7
    %v2321 = vrot.slane %v2125, 7
    %v2322 = vrot.slane %v2126, 7
    %v2331 = vmul.f32 %v2299, %v2315
    %v2332 = vmul.f32 %v2300, %v2316
    %v2333 = vmul.f32 %v2301, %v2317
    %v2334 = vmul.f32 %v2302, %v2318
    %v2335 = vmul.f32 %v2303, %v2319
    %v2336 = vmul.f32 %v2304, %v2320
    %v2337 = vmul.f32 %v2305, %v2321
    %v2338 = vmul.f32 %v2306, %v2322
    %2347 = vrot.lane.b32.xlu0 %v2283, 64
    %v2348 = vpop.permute.xlu0 %2347
    %2349 = vrot.lane.b32.xlu0 %v2284, 64
    %v2350 = vpop.permute.xlu0 %2349
    %2351 = vrot.lane.b32.xlu0 %v2285, 64
    %v2352 = vpop.permute.xlu0 %2351
    %2353 = vrot.lane.b32.xlu0 %v2286, 64
    %v2354 = vpop.permute.xlu0 %2353
    %2355 = vrot.lane.b32.xlu0 %v2287, 64
    %v2356 = vpop.permute.xlu0 %2355
    %2357 = vrot.lane.b32.xlu0 %v2288, 64
    %v2358 = vpop.permute.xlu0 %2357
    %2359 = vrot.lane.b32.xlu0 %v2289, 64
    %v2360 = vpop.permute.xlu0 %2359
    %2361 = vrot.lane.b32.xlu0 %v2290, 64
    %v2362 = vpop.permute.xlu0 %2361
    %v2371 = vmul.f32 %v2299, %v2348
    %v2372 = vmul.f32 %v2300, %v2350
    %v2373 = vmul.f32 %v2301, %v2352
    %v2374 = vmul.f32 %v2302, %v2354
    %v2375 = vmul.f32 %v2303, %v2356
    %v2376 = vmul.f32 %v2304, %v2358
    %v2377 = vmul.f32 %v2305, %v2360
    %v2378 = vmul.f32 %v2306, %v2362
    %2387 = vrot.lane.b32.xlu0 %v2371, 32
    %v2388 = vpop.permute.xlu0 %2387
    %2389 = vrot.lane.b32.xlu0 %v2372, 32
    %v2390 = vpop.permute.xlu0 %2389
    %2391 = vrot.lane.b32.xlu0 %v2373, 32
    %v2392 = vpop.permute.xlu0 %2391
    %2393 = vrot.lane.b32.xlu0 %v2374, 32
    %v2394 = vpop.permute.xlu0 %2393
    %2395 = vrot.lane.b32.xlu0 %v2375, 32
    %v2396 = vpop.permute.xlu0 %2395
    %2397 = vrot.lane.b32.xlu0 %v2376, 32
    %v2398 = vpop.permute.xlu0 %2397
    %2399 = vrot.lane.b32.xlu0 %v2377, 32
    %v2400 = vpop.permute.xlu0 %2399
    %2401 = vrot.lane.b32.xlu0 %v2378, 32
    %v2402 = vpop.permute.xlu0 %2401
    %v2411 = vadd.f32 %v2331, %v2388
    %v2412 = vadd.f32 %v2332, %v2390
    %v2413 = vadd.f32 %v2333, %v2392
    %v2414 = vadd.f32 %v2334, %v2394
    %v2415 = vadd.f32 %v2335, %v2396
    %v2416 = vadd.f32 %v2336, %v2398
    %v2417 = vadd.f32 %v2337, %v2400
    %v2418 = vadd.f32 %v2338, %v2402
    %v2419 = vtanh.pop %v2411
    %v2420 = vtanh.pop %v2412
    %v2421 = vtanh.pop %v2413
    %v2422 = vtanh.pop %v2414
    %v2423 = vtanh.pop %v2415
    %v2424 = vtanh.pop %v2416
    %v2425 = vtanh.pop %v2417
    %v2426 = vtanh.pop %v2418
    %2435 = vrot.lane.b32.xlu0 %v2419, 64
    %v2436 = vpop.permute.xlu0 %2435
    %2437 = vrot.lane.b32.xlu0 %v2420, 64
    %v2438 = vpop.permute.xlu0 %2437
    %2439 = vrot.lane.b32.xlu0 %v2421, 64
    %v2440 = vpop.permute.xlu0 %2439
    %2441 = vrot.lane.b32.xlu0 %v2422, 64
    %v2442 = vpop.permute.xlu0 %2441
    %2443 = vrot.lane.b32.xlu0 %v2423, 64
    %v2444 = vpop.permute.xlu0 %2443
    %2445 = vrot.lane.b32.xlu0 %v2424, 64
    %v2446 = vpop.permute.xlu0 %2445
    %2447 = vrot.lane.b32.xlu0 %v2425, 64
    %v2448 = vpop.permute.xlu0 %2447
    %2449 = vrot.lane.b32.xlu0 %v2426, 64
    %v2450 = vpop.permute.xlu0 %2449
    %v2459 = vmul.f32 %v2299, %v2436
    %v2460 = vmul.f32 %v2300, %v2438
    %v2461 = vmul.f32 %v2301, %v2440
    %v2462 = vmul.f32 %v2302, %v2442
    %v2463 = vmul.f32 %v2303, %v2444
    %v2464 = vmul.f32 %v2304, %v2446
    %v2465 = vmul.f32 %v2305, %v2448
    %v2466 = vmul.f32 %v2306, %v2450
    %v2467 = vld [vmem:[%s4] sm:$0x1]
    %v2469 = vlaneseq
    %v2470 = vshrl.u32 %v2469, 7
    %v2471 = vsub.s32 0, %v2470
    %v2472 = vrot.slane %v2467, %v2471
    %2473 = vrot.lane.b32.xlu0 %v2472, 96
    %v2474 = vpop.permute.xlu0 %2473
    %v2476 = vmul.f32 %v2459, %v2474
    %v2477 = vmul.f32 %v2460, %v2474
    %v2478 = vmul.f32 %v2461, %v2474
    %v2479 = vmul.f32 %v2462, %v2474
    %v2480 = vmul.f32 %v2463, %v2474
    %v2481 = vmul.f32 %v2464, %v2474
    %v2482 = vmul.f32 %v2465, %v2474
    %v2483 = vmul.f32 %v2466, %v2474
    %v2492 = vrot.slane %v2477, 7
    %v2493 = vrot.slane %v2478, 6
    %v2494 = vsel %vm441, %v2493, %v2492
    %v2495 = vrot.slane %v2479, 5
    %v2496 = vsel %vm444, %v2495, %v2494
    %v2497 = vrot.slane %v2480, 4
    %v2498 = vsel %vm447, %v2497, %v2496
    %v2499 = vrot.slane %v2481, 3
    %v2500 = vsel %vm450, %v2499, %v2498
    %v2501 = vrot.slane %v2482, 2
    %v2502 = vsel %vm453, %v2501, %v2500
    %v2503 = vrot.slane %v2483, 1
    %v2504 = vsel %vm456, %v2503, %v2502
    %2505 = vrot.lane.b32.xlu0 %v2476, 32
    %v2506 = vpop.permute.xlu0 %2505
    %2507 = vrot.lane.b32.xlu0 %v2504, 32
    %v2508 = vpop.permute.xlu0 %2507
    %vm2511 = vcmask 261127
    %v2512 = vsel %vm2511, %v2506, 0.0
    %2513 = vadd.xlane.f32.xlu0 %v2512
    %v2514 = vpop.xlane.xlu0 %2513
    %vm2515 = vcmask 260096
    %v2516 = vsel %vm2515, %v2508, 0.0
    %2517 = vadd.xlane.f32.xlu0 %v2516
    %v2518 = vpop.xlane.xlu0 %2517
    %v2519 = vld [vmem:[#allocation2] sm:$0x1]
    %v2521 = vlaneseq
    %v2522 = vshrl.u32 %v2521, 7
    %v2523 = vsub.s32 0, %v2522
    %v2524 = vrot.slane %v2519, %v2523
    %v2526 = vadd.f32 %v2514, %v2524
    %v2527 = vadd.f32 %v2518, %v2524
    %vm2528 = vcmask 7175
    %2529 = vst.msk [vmem:[%s6 - $0x7] sm:$0x80] %vm2528, %v2526
    %vm2530 = vcmask 6144
    %2531 = vst.msk [vmem:[%s6 + $0x1] sm:$0x7f] %vm2530, %v2527
    // Predicated region
    $region38: #{tpu_custom_call.1} parent=1 // pred_check
      _
    $region39: #{tpu_custom_call.1} parent=1 // pred_check_branch
      %2533 = sbr.rel (0) target = $region41
    $region40: #{tpu_custom_call.1} parent=1 // pred_region
      _
    $region41: #{tpu_custom_call.1} parent=1 // pred_fallthru
      _
    // Predicated region
    $region42: #{tpu_custom_call.1} parent=1 // pred_check
      _
    $region43: #{tpu_custom_call.1} parent=1 // pred_check_branch
      %2535 = sbr.rel (0) target = $region45
    $region44: #{tpu_custom_call.1} parent=1 // pred_region
      _
    $region45: #{tpu_custom_call.1} parent=1 // pred_fallthru
      _
    %2536 = vsyncpa [#allocation4], 1
    %2537 = vsyncpa [#allocation6], 1

</llo_original>
